<compile_context>
chip_gen: v5e
topology: v5e:2x2
jax: 0.10.0
libtpu: 0.0.40
codegen_flags: <defaults>
</compile_context>

<pallas_src>
import functools
import math

import jax
import jax.numpy as jnp
from jax import lax
from jax.experimental import pallas as pl
from jax.experimental.pallas import tpu as pltpu

# Matmul-input dtype (accumulation is always f32).  bf16 gives ~3-4x MXU
# throughput on v6e/v7x and halves resident weight VMEM; set to jnp.float32
# for exact f32 parity with the PyTorch reference.
MXU_DTYPE = jnp.bfloat16
LN_EPS = 1e-5
_SQRT_HALF = 0.7071067811865476  # 1/sqrt(2)


# ---------------------------- in-kernel helpers ----------------------------

def _mm(a, b):
    """MXU matmul with f32 accumulation."""
    return jnp.dot(a.astype(MXU_DTYPE), b.astype(MXU_DTYPE),
                   preferred_element_type=jnp.float32)


def _layer_norm(x, gamma, beta, eps=LN_EPS):
    """PyTorch-style LayerNorm (biased variance), f32 VPU/EUP math."""
    mu = jnp.mean(x, axis=-1, keepdims=True)
    d = x - mu
    var = jnp.mean(d * d, axis=-1, keepdims=True)
    return d * lax.rsqrt(var + eps) * gamma + beta


def _erf(x):
    # Abramowitz & Stegun 7.1.26 polynomial (|err| < 1.5e-7): uses only
    # abs/exp/mul/add so it lowers robustly on Mosaic (no lax.erf dependency).
    p = 0.3275911
    a1, a2, a3, a4, a5 = (0.254829592, -0.284496736, 1.421413741,
                          -1.453152027, 1.061405429)
    ax = jnp.abs(x)
    t = 1.0 / (1.0 + p * ax)
    poly = ((((a5 * t + a4) * t + a3) * t + a2) * t + a1) * t
    y = 1.0 - poly * jnp.exp(-ax * ax)
    return jnp.where(x < 0.0, -y, y)


def _gelu(x):
    return 0.5 * x * (1.0 + _erf(x * _SQRT_HALF))


# ---------------------------- Pallas kernels ----------------------------

def _linear_kernel(x_ref, w_ref, b_ref, o_ref):
    # y = x @ W + b, row-tiled over the grid.
    o_ref[...] = _mm(x_ref[...], w_ref[...]) + b_ref[...]


def _final_kernel(x_ref, g_ref, b_ref, w_ref, bh_ref, o_ref):
    # Fused final LayerNorm + head projection.  N=1 head: VPU multiply +
    # lane reduction instead of a (C,1) MXU matmul.
    h = _layer_norm(x_ref[...], g_ref[...], b_ref[...])
    o_ref[...] = jnp.sum(h * w_ref[...], axis=-1, keepdims=True) + bh_ref[...]


def _encoder_block_kernel(x_ref,
                          wqkv_ref, bqkv_ref,
                          wo_ref, bo_ref,
                          g1_ref, beta1_ref,
                          w1_ref, b1_ref, w2_ref, b2_ref,
                          g2_ref, beta2_ref,
                          o_ref,
                          *, batch_tile, seq_len, num_heads, depth, d_model):
    """One fused EncoderBlock for a group of batch elements (all in VMEM)."""
    Bt, T, C, H, D = batch_tile, seq_len, d_model, num_heads, depth
    R = Bt * T

    # Fold the batch group into the matmul row dimension.
    x = x_ref[...].reshape(R, C)                                  # (R, C) f32

    # Fused q/k/v projection; RoPE already folded into the q/k weight columns.
    qkv = _mm(x, wqkv_ref[...]) + bqkv_ref[...]                   # (R, 3C) f32

    wo = wo_ref[...]                                              # (C, C) bf16
    inv_scale = 1.0 / math.sqrt(D)
    attn = jnp.zeros((R, C), jnp.float32)

    # Per-head attention; the out-projection is accumulated per head
    # (lane-dense (R, C) accumulator, no narrow concat / relayout).
    # TODO(synk): for large H switch to lax.fori_loop + VMEM scratch to bound
    # live ranges; static loop is fine at small H and lowers most robustly.
    for h in range(H):
        qh = qkv[:, h * D:(h + 1) * D].reshape(Bt, T, D)
        kh = qkv[:, C + h * D:C + (h + 1) * D].reshape(Bt, T, D)
        vh = qkv[:, 2 * C + h * D:2 * C + (h + 1) * D].reshape(Bt, T, D)
        s = jnp.einsum('btd,bsd->bts',
                       qh.astype(MXU_DTYPE), kh.astype(MXU_DTYPE),
                       preferred_element_type=jnp.float32) * inv_scale
        s = s - jnp.max(s, axis=-1, keepdims=True)
        p = jnp.exp(s)
        p = p / jnp.sum(p, axis=-1, keepdims=True)                # exact softmax
        oh = jnp.einsum('bts,bsd->btd',
                        p.astype(MXU_DTYPE), vh.astype(MXU_DTYPE),
                        preferred_element_type=jnp.float32)
        attn = attn + _mm(oh.reshape(R, D), wo[h * D:(h + 1) * D, :])
    attn = attn + bo_ref[...]

    # Residual + LayerNorm 1.
    h1 = _layer_norm(x + attn, g1_ref[...], beta1_ref[...])

    # Feed-forward: linear -> exact(erf) GELU -> linear.
    # TODO(synk): nn.Dropout(0.1) assumed in eval mode -> identity (no RNG).
    f = _mm(h1, w1_ref[...]) + b1_ref[...]
    f = _gelu(f)
    f = _mm(f, w2_ref[...]) + b2_ref[...]

    # Residual + LayerNorm 2.
    out = _layer_norm(h1 + f, g2_ref[...], beta2_ref[...])
    o_ref[...] = out.reshape(Bt, T, C)


# ---------------------------- wrappers ----------------------------

def _row_tile(M):
    if M <= 512:
        return M
    for tm in (512, 256, 128, 64, 32, 16, 8):
        if M % tm == 0:
            return tm
    return M


def _pick_batch_tile(B, T, target_rows=256):
    """Batch elements per grid step so each matmul sees ~target_rows rows."""
    bt = max(1, min(B, max(1, target_rows // max(T, 1))))
    while B % bt != 0:
        bt -= 1
    # Prefer >= 2 evenly sized steps (megacore balance) when there is enough work.
    if B // bt == 1 and B % 2 == 0 and (B // 2) * T >= target_rows:
        bt = B // 2
    return bt


def _fold_rope_into_qk(qkv_w, qkv_b, num_heads):
    """Fold the reference RoPE (rotary position == head index) into W_q/W_k."""
    C = qkv_w.shape[0]
    H = num_heads
    D = C // H
    inv_freq = 1.0 / (10000.0 ** (jnp.arange(0, D, 2, dtype=jnp.float32) / D))
    ang = jnp.arange(H, dtype=jnp.float32)[:, None] * inv_freq[None, :]   # (H, D/2)
    cos, sin = jnp.cos(ang), jnp.sin(ang)

    def rot_cols(m):  # m: (..., C); columns laid out (head, pair, {even,odd})
        lead = m.shape[:-1]
        mp = m.reshape(lead + (H, D // 2, 2))
        we, wo = mp[..., 0], mp[..., 1]
        re = we * cos - wo * sin
        ro = we * sin + wo * cos
        return jnp.stack([re, ro], axis=-1).reshape(lead + (C,))

    w = jnp.concatenate([rot_cols(qkv_w[:, :C]),
                         rot_cols(qkv_w[:, C:2 * C]),
                         qkv_w[:, 2 * C:]], axis=1)
    b = jnp.concatenate([rot_cols(qkv_b[:C]),
                         rot_cols(qkv_b[C:2 * C]),
                         qkv_b[2 * C:]], axis=0)
    return w, b


def linear(x2d, w, b):
    M, K = x2d.shape
    N = w.shape[1]
    tm = _row_tile(M)
    return pl.pallas_call(
        _linear_kernel,
        grid=(M // tm,),
        in_specs=[pl.BlockSpec((tm, K), lambda i: (i, 0)),
                  pl.BlockSpec((K, N), lambda i: (0, 0)),
                  pl.BlockSpec((1, N), lambda i: (0, 0))],
        out_specs=pl.BlockSpec((tm, N), lambda i: (i, 0)),
        out_shape=jax.ShapeDtypeStruct((M, N), jnp.float32),
        compiler_params=pltpu.CompilerParams(dimension_semantics=("parallel",)),
    )(x2d, w.astype(MXU_DTYPE), b.reshape(1, N).astype(jnp.float32))


def final_ln_head(x2d, gamma, beta, w, bh):
    M, C = x2d.shape
    tm = _row_tile(M)
    return pl.pallas_call(
        _final_kernel,
        grid=(M // tm,),
        in_specs=[pl.BlockSpec((tm, C), lambda i: (i, 0)),
                  pl.BlockSpec((1, C), lambda i: (0, 0)),
                  pl.BlockSpec((1, C), lambda i: (0, 0)),
                  pl.BlockSpec((1, C), lambda i: (0, 0)),
                  pl.BlockSpec((1, 1), lambda i: (0, 0))],
        out_specs=pl.BlockSpec((tm, 1), lambda i: (i, 0)),
        out_shape=jax.ShapeDtypeStruct((M, 1), jnp.float32),
        compiler_params=pltpu.CompilerParams(dimension_semantics=("parallel",)),
    )(x2d, gamma.reshape(1, C), beta.reshape(1, C),
      w.reshape(1, C), bh.reshape(1, 1))


def encoder_block(x, p, num_heads):
    """One fused pallas_call per EncoderBlock, gridded over batch groups."""
    B, T, C = x.shape
    H = num_heads
    D = C // H
    F = p["ff_w1"].shape[1]
    bt = _pick_batch_tile(B, T)
    n_steps = B // bt
    R = bt * T

    # RoPE folded into q/k weights; weights stored bf16 (f32 accumulation).
    wqkv, bqkv = _fold_rope_into_qk(p["qkv_w"], p["qkv_b"], H)
    wqkv = wqkv.astype(MXU_DTYPE)
    wo = p["fc_w"].astype(MXU_DTYPE)
    w1 = p["ff_w1"].astype(MXU_DTYPE)
    w2 = p["ff_w2"].astype(MXU_DTYPE)

    # Explicit VMEM budget (weights double-buffered by the pipeline + f32
    # intermediates), capped at v7x's 64 MiB physical VMEM.
    est = (2 * 2 * (3 * C * C + C * C + 2 * C * F)          # bf16 weights x 2 bufs
           + 4 * (3 * C + 6 * C + F)                        # biases + LN params
           + 4 * R * (3 * C + 4 * C + F)                    # qkv / attn / ffn f32
           + 4 * 2 * bt * T * T                             # per-head scores/probs
           + 4 * 2 * 2 * bt * T * C)                        # x / out double buffers
    vmem_limit = int(min(64 * 2 ** 20, max(32 * 2 ** 20, 2 * est)))
    # TODO(synk): for very large d_ff on v7x, additionally tile the FFN weights
    # along F (inner grid axis) and single-buffer grid-invariant weight specs.

    flops = (2 * B * T * C * (3 * C) + 2 * B * T * C * C + 4 * B * T * C * F
             + 4 * B * H * T * T * D)
    transcendentals = B * H * T * T + 2 * B * T * F
    bytes_accessed = (4 * 2 * B * T * C
                      + 2 * (3 * C * C + C * C + 2 * C * F)
                      + 4 * (10 * C + F))
    cost = pl.CostEstimate(flops=int(flops),
                           transcendentals=int(transcendentals),
                           bytes_accessed=int(bytes_accessed))

    kernel = functools.partial(_encoder_block_kernel,
                               batch_tile=bt, seq_len=T,
                               num_heads=H, depth=D, d_model=C)
    return pl.pallas_call(
        kernel,
        grid=(n_steps,),
        in_specs=[
            pl.BlockSpec((bt, T, C), lambda b: (b, 0, 0)),   # x (batch group)
            pl.BlockSpec((C, 3 * C), lambda b: (0, 0)),      # W_qkv (RoPE folded)
            pl.BlockSpec((1, 3 * C), lambda b: (0, 0)),      # b_qkv (RoPE folded)
            pl.BlockSpec((C, C), lambda b: (0, 0)),          # out-proj weight
            pl.BlockSpec((1, C), lambda b: (0, 0)),          # out-proj bias
            pl.BlockSpec((1, C), lambda b: (0, 0)),          # LN1 gamma
            pl.BlockSpec((1, C), lambda b: (0, 0)),          # LN1 beta
            pl.BlockSpec((C, F), lambda b: (0, 0)),          # FFN w1
            pl.BlockSpec((1, F), lambda b: (0, 0)),          # FFN b1
            pl.BlockSpec((F, C), lambda b: (0, 0)),          # FFN w2
            pl.BlockSpec((1, C), lambda b: (0, 0)),          # FFN b2
            pl.BlockSpec((1, C), lambda b: (0, 0)),          # LN2 gamma
            pl.BlockSpec((1, C), lambda b: (0, 0)),          # LN2 beta
        ],
        out_specs=pl.BlockSpec((bt, T, C), lambda b: (b, 0, 0)),
        out_shape=jax.ShapeDtypeStruct((B, T, C), jnp.float32),
        compiler_params=pltpu.CompilerParams(
            dimension_semantics=("parallel",),
            vmem_limit_bytes=vmem_limit),
        cost_estimate=cost,
    )(x,
      wqkv, bqkv.reshape(1, 3 * C),
      wo, p["fc_b"].reshape(1, C),
      p["n1_g"].reshape(1, C), p["n1_b"].reshape(1, C),
      w1, p["ff_b1"].reshape(1, F),
      w2, p["ff_b2"].reshape(1, C),
      p["n2_g"].reshape(1, C), p["n2_b"].reshape(1, C))


def transformer_forward(x, params, num_heads):
    B, T, _ = x.shape
    d_model = params["in_w"].shape[1]
    h = linear(x.reshape(B * T, -1), params["in_w"], params["in_b"])
    h = h.reshape(B, T, d_model)
    for blk in params["blocks"]:
        h = encoder_block(h, blk, num_heads)
    out = final_ln_head(h.reshape(B * T, d_model),
                        params["ln_g"], params["ln_b"],
                        params["head_w"], params["head_b"])       # (B*T, 1)
    return out.reshape(B, T)                                      # squeeze(-1)


# ---------------------------- deterministic params ----------------------------

def init_params(key, input_dim, d_model, num_heads, d_ff, num_layers):
    def w(k, shape):
        return 0.02 * jax.random.normal(k, shape, jnp.float32)

    keys = jax.random.split(key, 2 + num_layers)
    params = {
        "in_w": w(keys[0], (input_dim, d_model)),
        "in_b": jnp.zeros((d_model,), jnp.float32),
        "head_w": w(keys[1], (d_model, 1)),
        "head_b": jnp.zeros((1,), jnp.float32),
        "ln_g": jnp.ones((d_model,), jnp.float32),
        "ln_b": jnp.zeros((d_model,), jnp.float32),
        "blocks": [],
    }
    for l in range(num_layers):
        ks = jax.random.split(keys[2 + l], 4)
        params["blocks"].append({
            "qkv_w": w(ks[0], (d_model, 3 * d_model)),
            "qkv_b": jnp.zeros((3 * d_model,), jnp.float32),
            "fc_w": w(ks[1], (d_model, d_model)),
            "fc_b": jnp.zeros((d_model,), jnp.float32),
            "ff_w1": w(ks[2], (d_model, d_ff)),
            "ff_b1": jnp.zeros((d_ff,), jnp.float32),
            "ff_w2": w(ks[3], (d_ff, d_model)),
            "ff_b2": jnp.zeros((d_model,), jnp.float32),
            "n1_g": jnp.ones((d_model,), jnp.float32),
            "n1_b": jnp.zeros((d_model,), jnp.float32),
            "n2_g": jnp.ones((d_model,), jnp.float32),
            "n2_b": jnp.zeros((d_model,), jnp.float32),
        })
    return params


if __name__ == "__main__":
    B, T = 2, 8
    input_dim, d_model, num_heads, d_ff, num_layers = 16, 32, 4, 64, 2

    key = jax.random.PRNGKey(0)
    kx, kp = jax.random.split(key)
    x = jax.random.normal(kx, (B, T, input_dim), jnp.float32)
    params = init_params(kp, input_dim, d_model, num_heads, d_ff, num_layers)

    fwd = jax.jit(transformer_forward, static_argnums=(2,))
    out = fwd(x, params, num_heads)
    out = jax.block_until_ready(out)

    assert out.shape == (B, T), out.shape
    assert bool(jnp.all(jnp.isfinite(out)))
    print("KERNEL_OK")
</pallas_src>

<mosaic_0001>
module attributes {stable_mosaic.version = 11 : i64} {
  func.func @_linear_kernel(%arg0: i32, %arg1: memref<16x16xf32, #tpu.memory_space<vmem>>, %arg2: memref<16x32xbf16, #tpu.memory_space<vmem>>, %arg3: memref<1x32xf32, #tpu.memory_space<vmem>>, %arg4: memref<16x32xf32, #tpu.memory_space<vmem>>) attributes {dimension_semantics = [#tpu.dimension_semantics<parallel>], iteration_bounds = array<i64: 1>, scalar_prefetch = 0 : i64, scratch_operands = 0 : i64, tpu.core_type = #tpu.core_type<tc>, window_params = [{transform_indices = @transform_0, window_bounds = array<i64: 16, 16>}, {pipeline_mode = #tpu.pipeline_mode<synchronous>, transform_indices = @transform_1, window_bounds = array<i64: 16, 32>}, {pipeline_mode = #tpu.pipeline_mode<synchronous>, transform_indices = @transform_2, window_bounds = array<i64: 1, 32>}, {transform_indices = @transform_3, window_bounds = array<i64: 16, 32>}]} {
    %c0 = arith.constant 0 : index
    %c0_0 = arith.constant 0 : index
    %0 = vector.load %arg1[%c0, %c0_0] : memref<16x16xf32, #tpu.memory_space<vmem>>, vector<16x16xf32>
    %c0_1 = arith.constant 0 : index
    %c0_2 = arith.constant 0 : index
    %1 = vector.load %arg2[%c0_1, %c0_2] : memref<16x32xbf16, #tpu.memory_space<vmem>>, vector<16x32xbf16>
    %2 = arith.truncf %0 : vector<16x16xf32> to vector<16x16xbf16>
    %cst = arith.constant dense<0.000000e+00> : vector<16x32xf32>
    %3 = tpu.matmul %2, %1, %cst {dimension_numbers = #tpu.dot_dimension_numbers<[1], [0], [0], [1], [0, 0, 1, 1], [], []>} : vector<16x16xbf16>, vector<16x32xbf16>, vector<16x32xf32> -> vector<16x32xf32>
    %c0_3 = arith.constant 0 : index
    %c0_4 = arith.constant 0 : index
    %4 = vector.load %arg3[%c0_3, %c0_4] : memref<1x32xf32, #tpu.memory_space<vmem>>, vector<1x32xf32>
    %5 = vector.broadcast %4 : vector<1x32xf32> to vector<16x32xf32>
    %6 = arith.addf %3, %5 : vector<16x32xf32>
    %c0_5 = arith.constant 0 : index
    %c0_6 = arith.constant 0 : index
    %7 = vector.load %arg4[%c0_5, %c0_6] : memref<16x32xf32, #tpu.memory_space<vmem>>, vector<16x32xf32>
    tpu.vector_store %arg4[%c0_5, %c0_6], %6 {strides = array<i32>} : memref<16x32xf32, #tpu.memory_space<vmem>>, vector<16x32xf32>,
    return
  }
  func.func @transform_0(%arg0: i32) -> (i32, i32) {
    %c0_i32 = arith.constant 0 : i32
    %c0_i32_0 = arith.constant 0 : i32
    return %arg0, %c0_i32 : i32, i32
  }
  func.func @transform_1(%arg0: i32) -> (i32, i32) {
    %c0_i32 = arith.constant 0 : i32
    %c0_i32_0 = arith.constant 0 : i32
    %c0_i32_1 = arith.constant 0 : i32
    return %c0_i32, %c0_i32_0 : i32, i32
  }
  func.func @transform_2(%arg0: i32) -> (i32, i32) {
    %c0_i32 = arith.constant 0 : i32
    %c0_i32_0 = arith.constant 0 : i32
    %c0_i32_1 = arith.constant 0 : i32
    return %c0_i32, %c0_i32_0 : i32, i32
  }
  func.func @transform_3(%arg0: i32) -> (i32, i32) {
    %c0_i32 = arith.constant 0 : i32
    %c0_i32_0 = arith.constant 0 : i32
    return %arg0, %c0_i32 : i32, i32
  }
}

module attributes {stable_mosaic.version = 11 : i64} {
  func.func @_final_kernel(%arg0: i32, %arg1: memref<16x32xf32, #tpu.memory_space<vmem>>, %arg2: memref<1x32xf32, #tpu.memory_space<vmem>>, %arg3: memref<1x32xf32, #tpu.memory_space<vmem>>, %arg4: memref<1x32xf32, #tpu.memory_space<vmem>>, %arg5: memref<1x1xf32, #tpu.memory_space<vmem>>, %arg6: memref<16x1xf32, #tpu.memory_space<vmem>>) attributes {dimension_semantics = [#tpu.dimension_semantics<parallel>], iteration_bounds = array<i64: 1>, scalar_prefetch = 0 : i64, scratch_operands = 0 : i64, tpu.core_type = #tpu.core_type<tc>, window_params = [{transform_indices = @transform_0, window_bounds = array<i64: 16, 32>}, {pipeline_mode = #tpu.pipeline_mode<synchronous>, transform_indices = @transform_1, window_bounds = array<i64: 1, 32>}, {pipeline_mode = #tpu.pipeline_mode<synchronous>, transform_indices = @transform_2, window_bounds = array<i64: 1, 32>}, {pipeline_mode = #tpu.pipeline_mode<synchronous>, transform_indices = @transform_3, window_bounds = array<i64: 1, 32>}, {pipeline_mode = #tpu.pipeline_mode<synchronous>, transform_indices = @transform_4, window_bounds = array<i64: 1, 1>}, {transform_indices = @transform_5, window_bounds = array<i64: 16, 1>}]} {
    %c0 = arith.constant 0 : index
    %c0_0 = arith.constant 0 : index
    %0 = vector.load %arg1[%c0, %c0_0] : memref<16x32xf32, #tpu.memory_space<vmem>>, vector<16x32xf32>
    %c0_1 = arith.constant 0 : index
    %c0_2 = arith.constant 0 : index
    %1 = vector.load %arg2[%c0_1, %c0_2] : memref<1x32xf32, #tpu.memory_space<vmem>>, vector<1x32xf32>
    %c0_3 = arith.constant 0 : index
    %c0_4 = arith.constant 0 : index
    %2 = vector.load %arg3[%c0_3, %c0_4] : memref<1x32xf32, #tpu.memory_space<vmem>>, vector<1x32xf32>
    %cst = arith.constant dense<0.000000e+00> : vector<16xf32>
    %3 = vector.multi_reduction <add>, %0, %cst [1] : vector<16x32xf32> to vector<16xf32>
    %4 = vector.shape_cast %3 : vector<16xf32> to vector<16x1xf32>
    %cst_5 = arith.constant 3.200000e+01 : f32
    %5 = vector.broadcast %cst_5 : f32 to vector<16x1xf32>
    %6 = arith.divf %4, %5 : vector<16x1xf32>
    %7 = vector.broadcast %6 : vector<16x1xf32> to vector<16x32xf32>
    %8 = arith.subf %0, %7 : vector<16x32xf32>
    %9 = arith.mulf %8, %8 : vector<16x32xf32>
    %cst_6 = arith.constant dense<0.000000e+00> : vector<16xf32>
    %10 = vector.multi_reduction <add>, %9, %cst_6 [1] : vector<16x32xf32> to vector<16xf32>
    %11 = vector.shape_cast %10 : vector<16xf32> to vector<16x1xf32>
    %cst_7 = arith.constant 3.200000e+01 : f32
    %12 = vector.broadcast %cst_7 : f32 to vector<16x1xf32>
    %13 = arith.divf %11, %12 : vector<16x1xf32>
    %cst_8 = arith.constant 9.99999974E-6 : f32
    %14 = vector.broadcast %cst_8 : f32 to vector<16x1xf32>
    %15 = arith.addf %13, %14 : vector<16x1xf32>
    %16 = math.rsqrt %15 : vector<16x1xf32>
    %17 = vector.broadcast %16 : vector<16x1xf32> to vector<16x32xf32>
    %18 = arith.mulf %8, %17 : vector<16x32xf32>
    %19 = vector.broadcast %1 : vector<1x32xf32> to vector<16x32xf32>
    %20 = arith.mulf %18, %19 : vector<16x32xf32>
    %21 = vector.broadcast %2 : vector<1x32xf32> to vector<16x32xf32>
    %22 = arith.addf %20, %21 : vector<16x32xf32>
    %c0_9 = arith.constant 0 : index
    %c0_10 = arith.constant 0 : index
    %23 = vector.load %arg4[%c0_9, %c0_10] : memref<1x32xf32, #tpu.memory_space<vmem>>, vector<1x32xf32>
    %24 = vector.broadcast %23 : vector<1x32xf32> to vector<16x32xf32>
    %25 = arith.mulf %22, %24 : vector<16x32xf32>
    %cst_11 = arith.constant dense<0.000000e+00> : vector<16xf32>
    %26 = vector.multi_reduction <add>, %25, %cst_11 [1] : vector<16x32xf32> to vector<16xf32>
    %27 = vector.shape_cast %26 : vector<16xf32> to vector<16x1xf32>
    %c0_12 = arith.constant 0 : index
    %c0_13 = arith.constant 0 : index
    %28 = vector.load %arg5[%c0_12, %c0_13] : memref<1x1xf32, #tpu.memory_space<vmem>>, vector<1x1xf32>
    %29 = vector.broadcast %28 : vector<1x1xf32> to vector<16x1xf32>
    %30 = arith.addf %27, %29 : vector<16x1xf32>
    %c0_14 = arith.constant 0 : index
    %c0_15 = arith.constant 0 : index
    %31 = vector.load %arg6[%c0_14, %c0_15] : memref<16x1xf32, #tpu.memory_space<vmem>>, vector<16x1xf32>
    tpu.vector_store %arg6[%c0_14, %c0_15], %30 {strides = array<i32>} : memref<16x1xf32, #tpu.memory_space<vmem>>, vector<16x1xf32>,
    return
  }
  func.func @transform_0(%arg0: i32) -> (i32, i32) {
    %c0_i32 = arith.constant 0 : i32
    %c0_i32_0 = arith.constant 0 : i32
    return %arg0, %c0_i32 : i32, i32
  }
  func.func @transform_1(%arg0: i32) -> (i32, i32) {
    %c0_i32 = arith.constant 0 : i32
    %c0_i32_0 = arith.constant 0 : i32
    %c0_i32_1 = arith.constant 0 : i32
    return %c0_i32, %c0_i32_0 : i32, i32
  }
  func.func @transform_2(%arg0: i32) -> (i32, i32) {
    %c0_i32 = arith.constant 0 : i32
    %c0_i32_0 = arith.constant 0 : i32
    %c0_i32_1 = arith.constant 0 : i32
    return %c0_i32, %c0_i32_0 : i32, i32
  }
  func.func @transform_3(%arg0: i32) -> (i32, i32) {
    %c0_i32 = arith.constant 0 : i32
    %c0_i32_0 = arith.constant 0 : i32
    %c0_i32_1 = arith.constant 0 : i32
    return %c0_i32, %c0_i32_0 : i32, i32
  }
  func.func @transform_4(%arg0: i32) -> (i32, i32) {
    %c0_i32 = arith.constant 0 : i32
    %c0_i32_0 = arith.constant 0 : i32
    %c0_i32_1 = arith.constant 0 : i32
    return %c0_i32, %c0_i32_0 : i32, i32
  }
  func.func @transform_5(%arg0: i32) -> (i32, i32) {
    %c0_i32 = arith.constant 0 : i32
    %c0_i32_0 = arith.constant 0 : i32
    return %arg0, %c0_i32 : i32, i32
  }
}

module attributes {stable_mosaic.version = 11 : i64} {
  func.func @_encoder_block_kernel(%arg0: i32, %arg1: memref<2x8x32xf32, #tpu.memory_space<vmem>>, %arg2: memref<32x96xbf16, #tpu.memory_space<vmem>>, %arg3: memref<1x96xf32, #tpu.memory_space<vmem>>, %arg4: memref<32x32xbf16, #tpu.memory_space<vmem>>, %arg5: memref<1x32xf32, #tpu.memory_space<vmem>>, %arg6: memref<1x32xf32, #tpu.memory_space<vmem>>, %arg7: memref<1x32xf32, #tpu.memory_space<vmem>>, %arg8: memref<32x64xbf16, #tpu.memory_space<vmem>>, %arg9: memref<1x64xf32, #tpu.memory_space<vmem>>, %arg10: memref<64x32xbf16, #tpu.memory_space<vmem>>, %arg11: memref<1x32xf32, #tpu.memory_space<vmem>>, %arg12: memref<1x32xf32, #tpu.memory_space<vmem>>, %arg13: memref<1x32xf32, #tpu.memory_space<vmem>>, %arg14: memref<2x8x32xf32, #tpu.memory_space<vmem>>) attributes {dimension_semantics = [#tpu.dimension_semantics<parallel>], iteration_bounds = array<i64: 1>, scalar_prefetch = 0 : i64, scratch_operands = 0 : i64, tpu.core_type = #tpu.core_type<tc>, window_params = [{transform_indices = @transform_0, window_bounds = array<i64: 2, 8, 32>}, {pipeline_mode = #tpu.pipeline_mode<synchronous>, transform_indices = @transform_1, window_bounds = array<i64: 32, 96>}, {pipeline_mode = #tpu.pipeline_mode<synchronous>, transform_indices = @transform_2, window_bounds = array<i64: 1, 96>}, {pipeline_mode = #tpu.pipeline_mode<synchronous>, transform_indices = @transform_3, window_bounds = array<i64: 32, 32>}, {pipeline_mode = #tpu.pipeline_mode<synchronous>, transform_indices = @transform_4, window_bounds = array<i64: 1, 32>}, {pipeline_mode = #tpu.pipeline_mode<synchronous>, transform_indices = @transform_5, window_bounds = array<i64: 1, 32>}, {pipeline_mode = #tpu.pipeline_mode<synchronous>, transform_indices = @transform_6, window_bounds = array<i64: 1, 32>}, {pipeline_mode = #tpu.pipeline_mode<synchronous>, transform_indices = @transform_7, window_bounds = array<i64: 32, 64>}, {pipeline_mode = #tpu.pipeline_mode<synchronous>, transform_indices = @transform_8, window_bounds = array<i64: 1, 64>}, {pipeline_mode = #tpu.pipeline_mode<synchronous>, transform_indices = @transform_9, window_bounds = array<i64: 64, 32>}, {pipeline_mode = #tpu.pipeline_mode<synchronous>, transform_indices = @transform_10, window_bounds = array<i64: 1, 32>}, {pipeline_mode = #tpu.pipeline_mode<synchronous>, transform_indices = @transform_11, window_bounds = array<i64: 1, 32>}, {pipeline_mode = #tpu.pipeline_mode<synchronous>, transform_indices = @transform_12, window_bounds = array<i64: 1, 32>}, {transform_indices = @transform_13, window_bounds = array<i64: 2, 8, 32>}]} {
    %c0 = arith.constant 0 : index
    %c0_0 = arith.constant 0 : index
    %c0_1 = arith.constant 0 : index
    %0 = vector.load %arg1[%c0, %c0_0, %c0_1] : memref<2x8x32xf32, #tpu.memory_space<vmem>>, vector<2x8x32xf32>
    %1 = vector.shape_cast %0 : vector<2x8x32xf32> to vector<16x32xf32>
    %c0_2 = arith.constant 0 : index
    %c0_3 = arith.constant 0 : index
    %2 = vector.load %arg2[%c0_2, %c0_3] : memref<32x96xbf16, #tpu.memory_space<vmem>>, vector<32x96xbf16>
    %3 = arith.truncf %1 : vector<16x32xf32> to vector<16x32xbf16>
    %cst = arith.constant dense<0.000000e+00> : vector<16x96xf32>
    %4 = tpu.matmul %3, %2, %cst {dimension_numbers = #tpu.dot_dimension_numbers<[1], [0], [0], [1], [0, 0, 1, 1], [], []>} : vector<16x32xbf16>, vector<32x96xbf16>, vector<16x96xf32> -> vector<16x96xf32>
    %c0_4 = arith.constant 0 : index
    %c0_5 = arith.constant 0 : index
    %5 = vector.load %arg3[%c0_4, %c0_5] : memref<1x96xf32, #tpu.memory_space<vmem>>, vector<1x96xf32>
    %6 = vector.broadcast %5 : vector<1x96xf32> to vector<16x96xf32>
    %7 = arith.addf %4, %6 : vector<16x96xf32>
    %c0_6 = arith.constant 0 : index
    %c0_7 = arith.constant 0 : index
    %8 = vector.load %arg4[%c0_6, %c0_7] : memref<32x32xbf16, #tpu.memory_space<vmem>>, vector<32x32xbf16>
    %cst_8 = arith.constant 0.000000e+00 : f32
    %9 = vector.broadcast %cst_8 : f32 to vector<16x32xf32>
    %10 = vector.extract_strided_slice %7 {offsets = [0, 0], sizes = [16, 8], strides = [1, 1]} : vector<16x96xf32> to vector<16x8xf32>
    %11 = vector.shape_cast %10 : vector<16x8xf32> to vector<2x8x8xf32>
    %12 = vector.extract_strided_slice %7 {offsets = [0, 32], sizes = [16, 8], strides = [1, 1]} : vector<16x96xf32> to vector<16x8xf32>
    %13 = vector.shape_cast %12 : vector<16x8xf32> to vector<2x8x8xf32>
    %14 = vector.extract_strided_slice %7 {offsets = [0, 64], sizes = [16, 8], strides = [1, 1]} : vector<16x96xf32> to vector<16x8xf32>
    %15 = vector.shape_cast %14 : vector<16x8xf32> to vector<2x8x8xf32>
    %16 = arith.truncf %11 : vector<2x8x8xf32> to vector<2x8x8xbf16>
    %17 = arith.truncf %13 : vector<2x8x8xf32> to vector<2x8x8xbf16>
    "tpu.trace_start"() <{level = 10 : i32, message = "btd,bsd->bts"}> : () -> ()
    %cst_9 = arith.constant dense<0.000000e+00> : vector<2x8x8xf32>
    %18 = tpu.matmul %16, %17, %cst_9 {dimension_numbers = #tpu.dot_dimension_numbers<[2], [2], [1], [1], [0, 0, 0, 1, 1, 1], [0], [0]>} : vector<2x8x8xbf16>, vector<2x8x8xbf16>, vector<2x8x8xf32> -> vector<2x8x8xf32>
    "tpu.trace_stop"() : () -> ()
    %cst_10 = arith.constant 0.353553385 : f32
    %19 = vector.broadcast %cst_10 : f32 to vector<2x8x8xf32>
    %20 = arith.mulf %18, %19 : vector<2x8x8xf32>
    %cst_11 = arith.constant dense<0xFF800000> : vector<2x8xf32>
    %21 = vector.multi_reduction <maximumf>, %20, %cst_11 [2] : vector<2x8x8xf32> to vector<2x8xf32>
    %22 = vector.shape_cast %21 : vector<2x8xf32> to vector<2x8x1xf32>
    %23 = vector.broadcast %22 : vector<2x8x1xf32> to vector<2x8x8xf32>
    %24 = arith.subf %20, %23 : vector<2x8x8xf32>
    %25 = math.exp %24 : vector<2x8x8xf32>
    %cst_12 = arith.constant dense<0.000000e+00> : vector<2x8xf32>
    %26 = vector.multi_reduction <add>, %25, %cst_12 [2] : vector<2x8x8xf32> to vector<2x8xf32>
    %27 = vector.shape_cast %26 : vector<2x8xf32> to vector<2x8x1xf32>
    %28 = vector.broadcast %27 : vector<2x8x1xf32> to vector<2x8x8xf32>
    %29 = arith.divf %25, %28 : vector<2x8x8xf32>
    %30 = arith.truncf %29 : vector<2x8x8xf32> to vector<2x8x8xbf16>
    %31 = arith.truncf %15 : vector<2x8x8xf32> to vector<2x8x8xbf16>
    "tpu.trace_start"() <{level = 10 : i32, message = "bts,bsd->btd"}> : () -> ()
    %cst_13 = arith.constant dense<0.000000e+00> : vector<2x8x8xf32>
    %32 = tpu.matmul %30, %31, %cst_13 {dimension_numbers = #tpu.dot_dimension_numbers<[2], [1], [1], [2], [0, 0, 0, 1, 1, 2], [0], [0]>} : vector<2x8x8xbf16>, vector<2x8x8xbf16>, vector<2x8x8xf32> -> vector<2x8x8xf32>
    "tpu.trace_stop"() : () -> ()
    %33 = vector.shape_cast %32 : vector<2x8x8xf32> to vector<16x8xf32>
    %34 = vector.extract_strided_slice %8 {offsets = [0, 0], sizes = [8, 32], strides = [1, 1]} : vector<32x32xbf16> to vector<8x32xbf16>
    %35 = arith.truncf %33 : vector<16x8xf32> to vector<16x8xbf16>
    %cst_14 = arith.constant dense<0.000000e+00> : vector<16x32xf32>
    %36 = tpu.matmul %35, %34, %cst_14 {dimension_numbers = #tpu.dot_dimension_numbers<[1], [0], [0], [1], [0, 0, 1, 1], [], []>} : vector<16x8xbf16>, vector<8x32xbf16>, vector<16x32xf32> -> vector<16x32xf32>
    %37 = arith.addf %9, %36 : vector<16x32xf32>
    %38 = vector.extract_strided_slice %7 {offsets = [0, 8], sizes = [16, 8], strides = [1, 1]} : vector<16x96xf32> to vector<16x8xf32>
    %39 = vector.shape_cast %38 : vector<16x8xf32> to vector<2x8x8xf32>
    %40 = vector.extract_strided_slice %7 {offsets = [0, 40], sizes = [16, 8], strides = [1, 1]} : vector<16x96xf32> to vector<16x8xf32>
    %41 = vector.shape_cast %40 : vector<16x8xf32> to vector<2x8x8xf32>
    %42 = vector.extract_strided_slice %7 {offsets = [0, 72], sizes = [16, 8], strides = [1, 1]} : vector<16x96xf32> to vector<16x8xf32>
    %43 = vector.shape_cast %42 : vector<16x8xf32> to vector<2x8x8xf32>
    %44 = arith.truncf %39 : vector<2x8x8xf32> to vector<2x8x8xbf16>
    %45 = arith.truncf %41 : vector<2x8x8xf32> to vector<2x8x8xbf16>
    "tpu.trace_start"() <{level = 10 : i32, message = "btd,bsd->bts"}> : () -> ()
    %cst_15 = arith.constant dense<0.000000e+00> : vector<2x8x8xf32>
    %46 = tpu.matmul %44, %45, %cst_15 {dimension_numbers = #tpu.dot_dimension_numbers<[2], [2], [1], [1], [0, 0, 0, 1, 1, 1], [0], [0]>} : vector<2x8x8xbf16>, vector<2x8x8xbf16>, vector<2x8x8xf32> -> vector<2x8x8xf32>
    "tpu.trace_stop"() : () -> ()
    %cst_16 = arith.constant 0.353553385 : f32
    %47 = vector.broadcast %cst_16 : f32 to vector<2x8x8xf32>
    %48 = arith.mulf %46, %47 : vector<2x8x8xf32>
    %cst_17 = arith.constant dense<0xFF800000> : vector<2x8xf32>
    %49 = vector.multi_reduction <maximumf>, %48, %cst_17 [2] : vector<2x8x8xf32> to vector<2x8xf32>
    %50 = vector.shape_cast %49 : vector<2x8xf32> to vector<2x8x1xf32>
    %51 = vector.broadcast %50 : vector<2x8x1xf32> to vector<2x8x8xf32>
    %52 = arith.subf %48, %51 : vector<2x8x8xf32>
    %53 = math.exp %52 : vector<2x8x8xf32>
    %cst_18 = arith.constant dense<0.000000e+00> : vector<2x8xf32>
    %54 = vector.multi_reduction <add>, %53, %cst_18 [2] : vector<2x8x8xf32> to vector<2x8xf32>
    %55 = vector.shape_cast %54 : vector<2x8xf32> to vector<2x8x1xf32>
    %56 = vector.broadcast %55 : vector<2x8x1xf32> to vector<2x8x8xf32>
    %57 = arith.divf %53, %56 : vector<2x8x8xf32>
    %58 = arith.truncf %57 : vector<2x8x8xf32> to vector<2x8x8xbf16>
    %59 = arith.truncf %43 : vector<2x8x8xf32> to vector<2x8x8xbf16>
    "tpu.trace_start"() <{level = 10 : i32, message = "bts,bsd->btd"}> : () -> ()
    %cst_19 = arith.constant dense<0.000000e+00> : vector<2x8x8xf32>
    %60 = tpu.matmul %58, %59, %cst_19 {dimension_numbers = #tpu.dot_dimension_numbers<[2], [1], [1], [2], [0, 0, 0, 1, 1, 2], [0], [0]>} : vector<2x8x8xbf16>, vector<2x8x8xbf16>, vector<2x8x8xf32> -> vector<2x8x8xf32>
    "tpu.trace_stop"() : () -> ()
    %61 = vector.shape_cast %60 : vector<2x8x8xf32> to vector<16x8xf32>
    %62 = vector.extract_strided_slice %8 {offsets = [8, 0], sizes = [8, 32], strides = [1, 1]} : vector<32x32xbf16> to vector<8x32xbf16>
    %63 = arith.truncf %61 : vector<16x8xf32> to vector<16x8xbf16>
    %cst_20 = arith.constant dense<0.000000e+00> : vector<16x32xf32>
    %64 = tpu.matmul %63, %62, %cst_20 {dimension_numbers = #tpu.dot_dimension_numbers<[1], [0], [0], [1], [0, 0, 1, 1], [], []>} : vector<16x8xbf16>, vector<8x32xbf16>, vector<16x32xf32> -> vector<16x32xf32>
    %65 = arith.addf %37, %64 : vector<16x32xf32>
    %66 = vector.extract_strided_slice %7 {offsets = [0, 16], sizes = [16, 8], strides = [1, 1]} : vector<16x96xf32> to vector<16x8xf32>
    %67 = vector.shape_cast %66 : vector<16x8xf32> to vector<2x8x8xf32>
    %68 = vector.extract_strided_slice %7 {offsets = [0, 48], sizes = [16, 8], strides = [1, 1]} : vector<16x96xf32> to vector<16x8xf32>
    %69 = vector.shape_cast %68 : vector<16x8xf32> to vector<2x8x8xf32>
    %70 = vector.extract_strided_slice %7 {offsets = [0, 80], sizes = [16, 8], strides = [1, 1]} : vector<16x96xf32> to vector<16x8xf32>
    %71 = vector.shape_cast %70 : vector<16x8xf32> to vector<2x8x8xf32>
    %72 = arith.truncf %67 : vector<2x8x8xf32> to vector<2x8x8xbf16>
    %73 = arith.truncf %69 : vector<2x8x8xf32> to vector<2x8x8xbf16>
    "tpu.trace_start"() <{level = 10 : i32, message = "btd,bsd->bts"}> : () -> ()
    %cst_21 = arith.constant dense<0.000000e+00> : vector<2x8x8xf32>
    %74 = tpu.matmul %72, %73, %cst_21 {dimension_numbers = #tpu.dot_dimension_numbers<[2], [2], [1], [1], [0, 0, 0, 1, 1, 1], [0], [0]>} : vector<2x8x8xbf16>, vector<2x8x8xbf16>, vector<2x8x8xf32> -> vector<2x8x8xf32>
    "tpu.trace_stop"() : () -> ()
    %cst_22 = arith.constant 0.353553385 : f32
    %75 = vector.broadcast %cst_22 : f32 to vector<2x8x8xf32>
    %76 = arith.mulf %74, %75 : vector<2x8x8xf32>
    %cst_23 = arith.constant dense<0xFF800000> : vector<2x8xf32>
    %77 = vector.multi_reduction <maximumf>, %76, %cst_23 [2] : vector<2x8x8xf32> to vector<2x8xf32>
    %78 = vector.shape_cast %77 : vector<2x8xf32> to vector<2x8x1xf32>
    %79 = vector.broadcast %78 : vector<2x8x1xf32> to vector<2x8x8xf32>
    %80 = arith.subf %76, %79 : vector<2x8x8xf32>
    %81 = math.exp %80 : vector<2x8x8xf32>
    %cst_24 = arith.constant dense<0.000000e+00> : vector<2x8xf32>
    %82 = vector.multi_reduction <add>, %81, %cst_24 [2] : vector<2x8x8xf32> to vector<2x8xf32>
    %83 = vector.shape_cast %82 : vector<2x8xf32> to vector<2x8x1xf32>
    %84 = vector.broadcast %83 : vector<2x8x1xf32> to vector<2x8x8xf32>
    %85 = arith.divf %81, %84 : vector<2x8x8xf32>
    %86 = arith.truncf %85 : vector<2x8x8xf32> to vector<2x8x8xbf16>
    %87 = arith.truncf %71 : vector<2x8x8xf32> to vector<2x8x8xbf16>
    "tpu.trace_start"() <{level = 10 : i32, message = "bts,bsd->btd"}> : () -> ()
    %cst_25 = arith.constant dense<0.000000e+00> : vector<2x8x8xf32>
    %88 = tpu.matmul %86, %87, %cst_25 {dimension_numbers = #tpu.dot_dimension_numbers<[2], [1], [1], [2], [0, 0, 0, 1, 1, 2], [0], [0]>} : vector<2x8x8xbf16>, vector<2x8x8xbf16>, vector<2x8x8xf32> -> vector<2x8x8xf32>
    "tpu.trace_stop"() : () -> ()
    %89 = vector.shape_cast %88 : vector<2x8x8xf32> to vector<16x8xf32>
    %90 = vector.extract_strided_slice %8 {offsets = [16, 0], sizes = [8, 32], strides = [1, 1]} : vector<32x32xbf16> to vector<8x32xbf16>
    %91 = arith.truncf %89 : vector<16x8xf32> to vector<16x8xbf16>
    %cst_26 = arith.constant dense<0.000000e+00> : vector<16x32xf32>
    %92 = tpu.matmul %91, %90, %cst_26 {dimension_numbers = #tpu.dot_dimension_numbers<[1], [0], [0], [1], [0, 0, 1, 1], [], []>} : vector<16x8xbf16>, vector<8x32xbf16>, vector<16x32xf32> -> vector<16x32xf32>
    %93 = arith.addf %65, %92 : vector<16x32xf32>
    %94 = vector.extract_strided_slice %7 {offsets = [0, 24], sizes = [16, 8], strides = [1, 1]} : vector<16x96xf32> to vector<16x8xf32>
    %95 = vector.shape_cast %94 : vector<16x8xf32> to vector<2x8x8xf32>
    %96 = vector.extract_strided_slice %7 {offsets = [0, 56], sizes = [16, 8], strides = [1, 1]} : vector<16x96xf32> to vector<16x8xf32>
    %97 = vector.shape_cast %96 : vector<16x8xf32> to vector<2x8x8xf32>
    %98 = vector.extract_strided_slice %7 {offsets = [0, 88], sizes = [16, 8], strides = [1, 1]} : vector<16x96xf32> to vector<16x8xf32>
    %99 = vector.shape_cast %98 : vector<16x8xf32> to vector<2x8x8xf32>
    %100 = arith.truncf %95 : vector<2x8x8xf32> to vector<2x8x8xbf16>
    %101 = arith.truncf %97 : vector<2x8x8xf32> to vector<2x8x8xbf16>
    "tpu.trace_start"() <{level = 10 : i32, message = "btd,bsd->bts"}> : () -> ()
    %cst_27 = arith.constant dense<0.000000e+00> : vector<2x8x8xf32>
    %102 = tpu.matmul %100, %101, %cst_27 {dimension_numbers = #tpu.dot_dimension_numbers<[2], [2], [1], [1], [0, 0, 0, 1, 1, 1], [0], [0]>} : vector<2x8x8xbf16>, vector<2x8x8xbf16>, vector<2x8x8xf32> -> vector<2x8x8xf32>
    "tpu.trace_stop"() : () -> ()
    %cst_28 = arith.constant 0.353553385 : f32
    %103 = vector.broadcast %cst_28 : f32 to vector<2x8x8xf32>
    %104 = arith.mulf %102, %103 : vector<2x8x8xf32>
    %cst_29 = arith.constant dense<0xFF800000> : vector<2x8xf32>
    %105 = vector.multi_reduction <maximumf>, %104, %cst_29 [2] : vector<2x8x8xf32> to vector<2x8xf32>
    %106 = vector.shape_cast %105 : vector<2x8xf32> to vector<2x8x1xf32>
    %107 = vector.broadcast %106 : vector<2x8x1xf32> to vector<2x8x8xf32>
    %108 = arith.subf %104, %107 : vector<2x8x8xf32>
    %109 = math.exp %108 : vector<2x8x8xf32>
    %cst_30 = arith.constant dense<0.000000e+00> : vector<2x8xf32>
    %110 = vector.multi_reduction <add>, %109, %cst_30 [2] : vector<2x8x8xf32> to vector<2x8xf32>
    %111 = vector.shape_cast %110 : vector<2x8xf32> to vector<2x8x1xf32>
    %112 = vector.broadcast %111 : vector<2x8x1xf32> to vector<2x8x8xf32>
    %113 = arith.divf %109, %112 : vector<2x8x8xf32>
    %114 = arith.truncf %113 : vector<2x8x8xf32> to vector<2x8x8xbf16>
    %115 = arith.truncf %99 : vector<2x8x8xf32> to vector<2x8x8xbf16>
    "tpu.trace_start"() <{level = 10 : i32, message = "bts,bsd->btd"}> : () -> ()
    %cst_31 = arith.constant dense<0.000000e+00> : vector<2x8x8xf32>
    %116 = tpu.matmul %114, %115, %cst_31 {dimension_numbers = #tpu.dot_dimension_numbers<[2], [1], [1], [2], [0, 0, 0, 1, 1, 2], [0], [0]>} : vector<2x8x8xbf16>, vector<2x8x8xbf16>, vector<2x8x8xf32> -> vector<2x8x8xf32>
    "tpu.trace_stop"() : () -> ()
    %117 = vector.shape_cast %116 : vector<2x8x8xf32> to vector<16x8xf32>
    %118 = vector.extract_strided_slice %8 {offsets = [24, 0], sizes = [8, 32], strides = [1, 1]} : vector<32x32xbf16> to vector<8x32xbf16>
    %119 = arith.truncf %117 : vector<16x8xf32> to vector<16x8xbf16>
    %cst_32 = arith.constant dense<0.000000e+00> : vector<16x32xf32>
    %120 = tpu.matmul %119, %118, %cst_32 {dimension_numbers = #tpu.dot_dimension_numbers<[1], [0], [0], [1], [0, 0, 1, 1], [], []>} : vector<16x8xbf16>, vector<8x32xbf16>, vector<16x32xf32> -> vector<16x32xf32>
    %121 = arith.addf %93, %120 : vector<16x32xf32>
    %c0_33 = arith.constant 0 : index
    %c0_34 = arith.constant 0 : index
    %122 = vector.load %arg5[%c0_33, %c0_34] : memref<1x32xf32, #tpu.memory_space<vmem>>, vector<1x32xf32>
    %123 = vector.broadcast %122 : vector<1x32xf32> to vector<16x32xf32>
    %124 = arith.addf %121, %123 : vector<16x32xf32>
    %125 = arith.addf %1, %124 : vector<16x32xf32>
    %c0_35 = arith.constant 0 : index
    %c0_36 = arith.constant 0 : index
    %126 = vector.load %arg6[%c0_35, %c0_36] : memref<1x32xf32, #tpu.memory_space<vmem>>, vector<1x32xf32>
    %c0_37 = arith.constant 0 : index
    %c0_38 = arith.constant 0 : index
    %127 = vector.load %arg7[%c0_37, %c0_38] : memref<1x32xf32, #tpu.memory_space<vmem>>, vector<1x32xf32>
    %cst_39 = arith.constant dense<0.000000e+00> : vector<16xf32>
    %128 = vector.multi_reduction <add>, %125, %cst_39 [1] : vector<16x32xf32> to vector<16xf32>
    %129 = vector.shape_cast %128 : vector<16xf32> to vector<16x1xf32>
    %cst_40 = arith.constant 3.200000e+01 : f32
    %130 = vector.broadcast %cst_40 : f32 to vector<16x1xf32>
    %131 = arith.divf %129, %130 : vector<16x1xf32>
    %132 = vector.broadcast %131 : vector<16x1xf32> to vector<16x32xf32>
    %133 = arith.subf %125, %132 : vector<16x32xf32>
    %134 = arith.mulf %133, %133 : vector<16x32xf32>
    %cst_41 = arith.constant dense<0.000000e+00> : vector<16xf32>
    %135 = vector.multi_reduction <add>, %134, %cst_41 [1] : vector<16x32xf32> to vector<16xf32>
    %136 = vector.shape_cast %135 : vector<16xf32> to vector<16x1xf32>
    %cst_42 = arith.constant 3.200000e+01 : f32
    %137 = vector.broadcast %cst_42 : f32 to vector<16x1xf32>
    %138 = arith.divf %136, %137 : vector<16x1xf32>
    %cst_43 = arith.constant 9.99999974E-6 : f32
    %139 = vector.broadcast %cst_43 : f32 to vector<16x1xf32>
    %140 = arith.addf %138, %139 : vector<16x1xf32>
    %141 = math.rsqrt %140 : vector<16x1xf32>
    %142 = vector.broadcast %141 : vector<16x1xf32> to vector<16x32xf32>
    %143 = arith.mulf %133, %142 : vector<16x32xf32>
    %144 = vector.broadcast %126 : vector<1x32xf32> to vector<16x32xf32>
    %145 = arith.mulf %143, %144 : vector<16x32xf32>
    %146 = vector.broadcast %127 : vector<1x32xf32> to vector<16x32xf32>
    %147 = arith.addf %145, %146 : vector<16x32xf32>
    %c0_44 = arith.constant 0 : index
    %c0_45 = arith.constant 0 : index
    %148 = vector.load %arg8[%c0_44, %c0_45] : memref<32x64xbf16, #tpu.memory_space<vmem>>, vector<32x64xbf16>
    %149 = arith.truncf %147 : vector<16x32xf32> to vector<16x32xbf16>
    %cst_46 = arith.constant dense<0.000000e+00> : vector<16x64xf32>
    %150 = tpu.matmul %149, %148, %cst_46 {dimension_numbers = #tpu.dot_dimension_numbers<[1], [0], [0], [1], [0, 0, 1, 1], [], []>} : vector<16x32xbf16>, vector<32x64xbf16>, vector<16x64xf32> -> vector<16x64xf32>
    %c0_47 = arith.constant 0 : index
    %c0_48 = arith.constant 0 : index
    %151 = vector.load %arg9[%c0_47, %c0_48] : memref<1x64xf32, #tpu.memory_space<vmem>>, vector<1x64xf32>
    %152 = vector.broadcast %151 : vector<1x64xf32> to vector<16x64xf32>
    %153 = arith.addf %150, %152 : vector<16x64xf32>
    %cst_49 = arith.constant 5.000000e-01 : f32
    %154 = vector.broadcast %cst_49 : f32 to vector<16x64xf32>
    %155 = arith.mulf %154, %153 : vector<16x64xf32>
    %cst_50 = arith.constant 0.707106769 : f32
    %156 = vector.broadcast %cst_50 : f32 to vector<16x64xf32>
    %157 = arith.mulf %153, %156 : vector<16x64xf32>
    %158 = math.absf %157 : vector<16x64xf32>
    %cst_51 = arith.constant 0.327591091 : f32
    %159 = vector.broadcast %cst_51 : f32 to vector<16x64xf32>
    %160 = arith.mulf %159, %158 : vector<16x64xf32>
    %cst_52 = arith.constant 1.000000e+00 : f32
    %161 = vector.broadcast %cst_52 : f32 to vector<16x64xf32>
    %162 = arith.addf %161, %160 : vector<16x64xf32>
    %cst_53 = arith.constant 1.000000e+00 : f32
    %163 = vector.broadcast %cst_53 : f32 to vector<16x64xf32>
    %164 = arith.divf %163, %162 : vector<16x64xf32>
    %cst_54 = arith.constant 1.06140542 : f32
    %165 = vector.broadcast %cst_54 : f32 to vector<16x64xf32>
    %166 = arith.mulf %165, %164 : vector<16x64xf32>
    %cst_55 = arith.constant -1.45315206 : f32
    %167 = vector.broadcast %cst_55 : f32 to vector<16x64xf32>
    %168 = arith.addf %166, %167 : vector<16x64xf32>
    %169 = arith.mulf %168, %164 : vector<16x64xf32>
    %cst_56 = arith.constant 1.42141378 : f32
    %170 = vector.broadcast %cst_56 : f32 to vector<16x64xf32>
    %171 = arith.addf %169, %170 : vector<16x64xf32>
    %172 = arith.mulf %171, %164 : vector<16x64xf32>
    %cst_57 = arith.constant -0.284496725 : f32
    %173 = vector.broadcast %cst_57 : f32 to vector<16x64xf32>
    %174 = arith.addf %172, %173 : vector<16x64xf32>
    %175 = arith.mulf %174, %164 : vector<16x64xf32>
    %cst_58 = arith.constant 0.254829586 : f32
    %176 = vector.broadcast %cst_58 : f32 to vector<16x64xf32>
    %177 = arith.addf %175, %176 : vector<16x64xf32>
    %178 = arith.mulf %177, %164 : vector<16x64xf32>
    %cst_59 = arith.constant 0.000000e+00 : f32
    %179 = vector.broadcast %cst_59 : f32 to vector<16x64xf32>
    %180 = arith.subf %179, %158 : vector<16x64xf32>
    %181 = arith.mulf %180, %158 : vector<16x64xf32>
    %182 = math.exp %181 : vector<16x64xf32>
    %183 = arith.mulf %178, %182 : vector<16x64xf32>
    %cst_60 = arith.constant 1.000000e+00 : f32
    %184 = vector.broadcast %cst_60 : f32 to vector<16x64xf32>
    %185 = arith.subf %184, %183 : vector<16x64xf32>
    %cst_61 = arith.constant 0.000000e+00 : f32
    %186 = vector.broadcast %cst_61 : f32 to vector<16x64xf32>
    %187 = arith.cmpf olt, %157, %186 : vector<16x64xf32>
    %cst_62 = arith.constant 0.000000e+00 : f32
    %188 = vector.broadcast %cst_62 : f32 to vector<16x64xf32>
    %189 = arith.subf %188, %185 : vector<16x64xf32>
    %190 = arith.select %187, %189, %185 : vector<16x64xi1>, vector<16x64xf32>
    %cst_63 = arith.constant 1.000000e+00 : f32
    %191 = vector.broadcast %cst_63 : f32 to vector<16x64xf32>
    %192 = arith.addf %191, %190 : vector<16x64xf32>
    %193 = arith.mulf %155, %192 : vector<16x64xf32>
    %c0_64 = arith.constant 0 : index
    %c0_65 = arith.constant 0 : index
    %194 = vector.load %arg10[%c0_64, %c0_65] : memref<64x32xbf16, #tpu.memory_space<vmem>>, vector<64x32xbf16>
    %195 = arith.truncf %193 : vector<16x64xf32> to vector<16x64xbf16>
    %cst_66 = arith.constant dense<0.000000e+00> : vector<16x32xf32>
    %196 = tpu.matmul %195, %194, %cst_66 {dimension_numbers = #tpu.dot_dimension_numbers<[1], [0], [0], [1], [0, 0, 1, 1], [], []>} : vector<16x64xbf16>, vector<64x32xbf16>, vector<16x32xf32> -> vector<16x32xf32>
    %c0_67 = arith.constant 0 : index
    %c0_68 = arith.constant 0 : index
    %197 = vector.load %arg11[%c0_67, %c0_68] : memref<1x32xf32, #tpu.memory_space<vmem>>, vector<1x32xf32>
    %198 = vector.broadcast %197 : vector<1x32xf32> to vector<16x32xf32>
    %199 = arith.addf %196, %198 : vector<16x32xf32>
    %200 = arith.addf %147, %199 : vector<16x32xf32>
    %c0_69 = arith.constant 0 : index
    %c0_70 = arith.constant 0 : index
    %201 = vector.load %arg12[%c0_69, %c0_70] : memref<1x32xf32, #tpu.memory_space<vmem>>, vector<1x32xf32>
    %c0_71 = arith.constant 0 : index
    %c0_72 = arith.constant 0 : index
    %202 = vector.load %arg13[%c0_71, %c0_72] : memref<1x32xf32, #tpu.memory_space<vmem>>, vector<1x32xf32>
    %cst_73 = arith.constant dense<0.000000e+00> : vector<16xf32>
    %203 = vector.multi_reduction <add>, %200, %cst_73 [1] : vector<16x32xf32> to vector<16xf32>
    %204 = vector.shape_cast %203 : vector<16xf32> to vector<16x1xf32>
    %cst_74 = arith.constant 3.200000e+01 : f32
    %205 = vector.broadcast %cst_74 : f32 to vector<16x1xf32>
    %206 = arith.divf %204, %205 : vector<16x1xf32>
    %207 = vector.broadcast %206 : vector<16x1xf32> to vector<16x32xf32>
    %208 = arith.subf %200, %207 : vector<16x32xf32>
    %209 = arith.mulf %208, %208 : vector<16x32xf32>
    %cst_75 = arith.constant dense<0.000000e+00> : vector<16xf32>
    %210 = vector.multi_reduction <add>, %209, %cst_75 [1] : vector<16x32xf32> to vector<16xf32>
    %211 = vector.shape_cast %210 : vector<16xf32> to vector<16x1xf32>
    %cst_76 = arith.constant 3.200000e+01 : f32
    %212 = vector.broadcast %cst_76 : f32 to vector<16x1xf32>
    %213 = arith.divf %211, %212 : vector<16x1xf32>
    %cst_77 = arith.constant 9.99999974E-6 : f32
    %214 = vector.broadcast %cst_77 : f32 to vector<16x1xf32>
    %215 = arith.addf %213, %214 : vector<16x1xf32>
    %216 = math.rsqrt %215 : vector<16x1xf32>
    %217 = vector.broadcast %216 : vector<16x1xf32> to vector<16x32xf32>
    %218 = arith.mulf %208, %217 : vector<16x32xf32>
    %219 = vector.broadcast %201 : vector<1x32xf32> to vector<16x32xf32>
    %220 = arith.mulf %218, %219 : vector<16x32xf32>
    %221 = vector.broadcast %202 : vector<1x32xf32> to vector<16x32xf32>
    %222 = arith.addf %220, %221 : vector<16x32xf32>
    %223 = vector.shape_cast %222 : vector<16x32xf32> to vector<2x8x32xf32>
    %c0_78 = arith.constant 0 : index
    %c0_79 = arith.constant 0 : index
    %c0_80 = arith.constant 0 : index
    %224 = vector.load %arg14[%c0_78, %c0_79, %c0_80] : memref<2x8x32xf32, #tpu.memory_space<vmem>>, vector<2x8x32xf32>
    tpu.vector_store %arg14[%c0_78, %c0_79, %c0_80], %223 {strides = array<i32>} : memref<2x8x32xf32, #tpu.memory_space<vmem>>, vector<2x8x32xf32>,
    return
  }
  func.func @transform_0(%arg0: i32) -> (i32, i32, i32) {
    %c0_i32 = arith.constant 0 : i32
    %c0_i32_0 = arith.constant 0 : i32
    %c0_i32_1 = arith.constant 0 : i32
    return %arg0, %c0_i32, %c0_i32_0 : i32, i32, i32
  }
  func.func @transform_1(%arg0: i32) -> (i32, i32) {
    %c0_i32 = arith.constant 0 : i32
    %c0_i32_0 = arith.constant 0 : i32
    %c0_i32_1 = arith.constant 0 : i32
    return %c0_i32, %c0_i32_0 : i32, i32
  }
  func.func @transform_2(%arg0: i32) -> (i32, i32) {
    %c0_i32 = arith.constant 0 : i32
    %c0_i32_0 = arith.constant 0 : i32
    %c0_i32_1 = arith.constant 0 : i32
    return %c0_i32, %c0_i32_0 : i32, i32
  }
  func.func @transform_3(%arg0: i32) -> (i32, i32) {
    %c0_i32 = arith.constant 0 : i32
    %c0_i32_0 = arith.constant 0 : i32
    %c0_i32_1 = arith.constant 0 : i32
    return %c0_i32, %c0_i32_0 : i32, i32
  }
  func.func @transform_4(%arg0: i32) -> (i32, i32) {
    %c0_i32 = arith.constant 0 : i32
    %c0_i32_0 = arith.constant 0 : i32
    %c0_i32_1 = arith.constant 0 : i32
    return %c0_i32, %c0_i32_0 : i32, i32
  }
  func.func @transform_5(%arg0: i32) -> (i32, i32) {
    %c0_i32 = arith.constant 0 : i32
    %c0_i32_0 = arith.constant 0 : i32
    %c0_i32_1 = arith.constant 0 : i32
    return %c0_i32, %c0_i32_0 : i32, i32
  }
  func.func @transform_6(%arg0: i32) -> (i32, i32) {
    %c0_i32 = arith.constant 0 : i32
    %c0_i32_0 = arith.constant 0 : i32
    %c0_i32_1 = arith.constant 0 : i32
    return %c0_i32, %c0_i32_0 : i32, i32
  }
  func.func @transform_7(%arg0: i32) -> (i32, i32) {
    %c0_i32 = arith.constant 0 : i32
    %c0_i32_0 = arith.constant 0 : i32
    %c0_i32_1 = arith.constant 0 : i32
    return %c0_i32, %c0_i32_0 : i32, i32
  }
  func.func @transform_8(%arg0: i32) -> (i32, i32) {
    %c0_i32 = arith.constant 0 : i32
    %c0_i32_0 = arith.constant 0 : i32
    %c0_i32_1 = arith.constant 0 : i32
    return %c0_i32, %c0_i32_0 : i32, i32
  }
  func.func @transform_9(%arg0: i32) -> (i32, i32) {
    %c0_i32 = arith.constant 0 : i32
    %c0_i32_0 = arith.constant 0 : i32
    %c0_i32_1 = arith.constant 0 : i32
    return %c0_i32, %c0_i32_0 : i32, i32
  }
  func.func @transform_10(%arg0: i32) -> (i32, i32) {
    %c0_i32 = arith.constant 0 : i32
    %c0_i32_0 = arith.constant 0 : i32
    %c0_i32_1 = arith.constant 0 : i32
    return %c0_i32, %c0_i32_0 : i32, i32
  }
  func.func @transform_11(%arg0: i32) -> (i32, i32) {
    %c0_i32 = arith.constant 0 : i32
    %c0_i32_0 = arith.constant 0 : i32
    %c0_i32_1 = arith.constant 0 : i32
    return %c0_i32, %c0_i32_0 : i32, i32
  }
  func.func @transform_12(%arg0: i32) -> (i32, i32) {
    %c0_i32 = arith.constant 0 : i32
    %c0_i32_0 = arith.constant 0 : i32
    %c0_i32_1 = arith.constant 0 : i32
    return %c0_i32, %c0_i32_0 : i32, i32
  }
  func.func @transform_13(%arg0: i32) -> (i32, i32, i32) {
    %c0_i32 = arith.constant 0 : i32
    %c0_i32_0 = arith.constant 0 : i32
    %c0_i32_1 = arith.constant 0 : i32
    return %arg0, %c0_i32, %c0_i32_0 : i32, i32, i32
  }
}

</mosaic_0001>

<llo_original>
// kernel: transformer_forward.4
$region0: #{transformer_forward.4}
  #allocation0 [shape = 'u32[]', space=smem, size = 0x4, offset = 0x4, fixed_abs, tag = 'smem constant byte address 0x4 - core index']
  #allocation1 [shape = 'u32[72,128]{1,0:T(1,128)}', space=vmem, size = 0x9000, scoped, tag = 'internal scratch']
  %s0 = inlined_call_operand.vmem [shape: f32[16,16], index: 0, kind: input, shape index: {}]
  %s1 = inlined_call_operand.vmem [shape: bf16[16,32], index: 1, kind: input, shape index: {}]
  %s2 = inlined_call_operand.vmem [shape: f32[1,32], index: 2, kind: input, shape index: {}]
  %s3 = inlined_call_operand.vmem [shape: f32[16,32], index: 3, kind: output, shape index: {}]
  %s4 = sld [smem:[#allocation0]]
  $region22: #{transformer_forward.4} parent=0
    _
  %s6 = ssub.s32 1, %s4
  %s7 = scalar_select 0, %s6, %s4
  // Predicated region
  $region2: #{transformer_forward.4} parent=0 // pred_check
    _
  $region3: #{transformer_forward.4} parent=0 // pred_check_branch
    %9 = sbr.rel (0) target = $region5
  $region4: #{transformer_forward.4} parent=0 // pred_region
    _
  $region5: #{transformer_forward.4} parent=0 // pred_fallthru
    _
  // Predicated region
  $region6: #{transformer_forward.4} parent=0 // pred_check
    _
  $region7: #{transformer_forward.4} parent=0 // pred_check_branch
    %11 = sbr.rel (0) target = $region9
  $region8: #{transformer_forward.4} parent=0 // pred_region
    _
  $region9: #{transformer_forward.4} parent=0 // pred_fallthru
    _
  // Predicated region
  $region10: #{transformer_forward.4} parent=0 // pred_check
    _
  $region11: #{transformer_forward.4} parent=0 // pred_check_branch
    %13 = sbr.rel (0) target = $region13
  $region12: #{transformer_forward.4} parent=0 // pred_region
    _
  $region13: #{transformer_forward.4} parent=0 // pred_fallthru
    _
  %v15 = vld [vmem:[%s0] sm:$0xff]
  %v16 = vld [vmem:[%s0 + $0x8] sm:$0xff]
  %v17 = vld [vmem:[%s1] sm:$0xf]
  %v18 = vld [vmem:[%s1 + $0x4] sm:$0xf]
  %v19 = vpack.c.bf16 %v16, %v15
  %v20 = vld [vmem:[%s2] sm:$0x1]
  %v22 = vperm.slane %v20, 0
  %v26 = vunpack.c.l.b16 %v17
  %v27 = vunpack.c.l.b16 %v18
  %v28 = vpack.c.b16 %v27, %v26
  %vm30 = vcmask 130048
  %v32 = vsel %vm30, %v19, 0
  %34 = vmatpush.bf16.msra.mxu0 0
  %35 = vmatpush.bf16.msra.mxu0 0
  %36 = vmatpush.bf16.msra.mxu0 0
  %37 = vmatpush.bf16.msra.mxu0 0
  %38 = vmatpush.bf16.msra.mxu0 0
  %39 = vmatpush.bf16.msra.mxu0 0
  %40 = vmatpush.bf16.msra.mxu0 0
  %41 = vmatpush.bf16.msra.mxu0 %v28
  %42 = vmatmul.bf16.gmra.mxu0 %v32
  %v43 = vpop.f32.mrf.mxu0
  %v44 = vadd.f32 %v22, %v43
  %v45 = vpop.f32.mrf.mxu0
  %v46 = vadd.f32 %v22, %v45
  %47 = vdwg.mxu0
  %vm48 = vcmask 261120
  %49 = vst.msk [vmem:[%s3] sm:$0xff] %vm48, %v44
  %50 = vst.msk [vmem:[%s3 + $0x8] sm:$0xff] %vm48, %v46
  // Predicated region
  $region14: #{transformer_forward.4} parent=0 // pred_check
    _
  $region15: #{transformer_forward.4} parent=0 // pred_check_branch
    %52 = sbr.rel (0) target = $region17
  $region16: #{transformer_forward.4} parent=0 // pred_region
    _
  $region17: #{transformer_forward.4} parent=0 // pred_fallthru
    _
  // Predicated region
  $region18: #{transformer_forward.4} parent=0 // pred_check
    _
  $region19: #{transformer_forward.4} parent=0 // pred_check_branch
    %54 = sbr.rel (0) target = $region21
  $region20: #{transformer_forward.4} parent=0 // pred_region
    _
  $region21: #{transformer_forward.4} parent=0 // pred_fallthru
    _

// kernel: transformer_forward.7
$region0: #{transformer_forward.7}
  #allocation0 [shape = 'u32[]', space=smem, size = 0x4, offset = 0x4, fixed_abs, tag = 'smem constant byte address 0x4 - core index']
  #allocation1 [shape = 'u32[72,128]{1,0:T(1,128)}', space=vmem, size = 0x9000, scoped, tag = 'internal scratch']
  #allocation2 [shape = 'f32[1,1]{1,0:T(1,128)S(1)}', space=vmem, size = 0x200, scoped, tag = 'scoped memory for transformer_forward.7']
  %s0 = inlined_call_operand.vmem [shape: f32[16,32], index: 0, kind: input, shape index: {}]
  %s1 = inlined_call_operand.vmem [shape: f32[1,32], index: 1, kind: input, shape index: {}]
  %s2 = inlined_call_operand.vmem [shape: f32[1,32], index: 2, kind: input, shape index: {}]
  %s3 = inlined_call_operand.vmem [shape: f32[1,32], index: 3, kind: input, shape index: {}]
  %s4 = inlined_call_operand.<no memory space> [shape: f32[1,1], index: 4, kind: input, shape index: {}]
  %s5 = inlined_call_operand.vmem [shape: f32[16,1], index: 5, kind: output, shape index: {}]
  %s6 = sld [smem:[#allocation0]]
  $region30: #{transformer_forward.7} parent=0
    _
  %s8 = ssub.s32 1, %s6
  %s9 = scalar_select 0, %s8, %s6
  %v10 = vstv %s4
  %11 = vst [vmem:[#allocation2] sm:$0x1] %v10
  // Predicated region
  $region2: #{transformer_forward.7} parent=0 // pred_check
    _
  $region3: #{transformer_forward.7} parent=0 // pred_check_branch
    %13 = sbr.rel (0) target = $region5
  $region4: #{transformer_forward.7} parent=0 // pred_region
    _
  $region5: #{transformer_forward.7} parent=0 // pred_fallthru
    _
  // Predicated region
  $region6: #{transformer_forward.7} parent=0 // pred_check
    _
  $region7: #{transformer_forward.7} parent=0 // pred_check_branch
    %15 = sbr.rel (0) target = $region9
  $region8: #{transformer_forward.7} parent=0 // pred_region
    _
  $region9: #{transformer_forward.7} parent=0 // pred_fallthru
    _
  // Predicated region
  $region10: #{transformer_forward.7} parent=0 // pred_check
    _
  $region11: #{transformer_forward.7} parent=0 // pred_check_branch
    %17 = sbr.rel (0) target = $region13
  $region12: #{transformer_forward.7} parent=0 // pred_region
    _
  $region13: #{transformer_forward.7} parent=0 // pred_fallthru
    _
  // Predicated region
  $region14: #{transformer_forward.7} parent=0 // pred_check
    _
  $region15: #{transformer_forward.7} parent=0 // pred_check_branch
    %19 = sbr.rel (0) target = $region17
  $region16: #{transformer_forward.7} parent=0 // pred_region
    _
  $region17: #{transformer_forward.7} parent=0 // pred_fallthru
    _
  // Predicated region
  $region18: #{transformer_forward.7} parent=0 // pred_check
    _
  $region19: #{transformer_forward.7} parent=0 // pred_check_branch
    %21 = sbr.rel (0) target = $region21
  $region20: #{transformer_forward.7} parent=0 // pred_region
    _
  $region21: #{transformer_forward.7} parent=0 // pred_fallthru
    _
  %v22 = vld [vmem:[%s0] sm:$0xff]
  %v23 = vld [vmem:[%s0 + $0x8] sm:$0xff]
  %v24 = vld [vmem:[%s1] sm:$0x1]
  %v25 = vld [vmem:[%s2] sm:$0x1]
  %vm26 = vcmask 261120
  %v27 = vsel %vm26, %v22, 0.0
  %28 = vadd.xlane.f32.xlu0 %v27
  %v29 = vpop.xlane.xlu0 %28
  %v30 = vsel %vm26, %v23, 0.0
  %31 = vadd.xlane.f32.xlu0 %v30
  %v32 = vpop.xlane.xlu0 %31
  %v33 = vrcp.pop 32.0
  %v34 = vmul.f32 32.0, %v33
  %v35 = vsub.f32 1.0, %v34
  %v36 = vmul.f32 %v33, %v35
  %v37 = vadd.f32 %v33, %v36
  %vm38 = vweird.f32 %v33
  %v39 = vsel %vm38, %v33, %v37
  %v40 = vmul.f32 %v29, %v39
  %v41 = vmul.f32 %v32, %v39
  %v42 = vsub.f32 %v22, %v40
  %v43 = vsub.f32 %v23, %v41
  %v44 = vmul.f32 %v42, %v42
  %v45 = vmul.f32 %v43, %v43
  %v46 = vsel %vm26, %v44, 0.0
  %47 = vadd.xlane.f32.xlu0 %v46
  %v48 = vpop.xlane.xlu0 %47
  %v49 = vsel %vm26, %v45, 0.0
  %50 = vadd.xlane.f32.xlu0 %v49
  %v51 = vpop.xlane.xlu0 %50
  %v52 = vmul.f32 %v48, %v39
  %v53 = vmul.f32 %v51, %v39
  %v54 = vadd.f32 %v52, 1e-05
  %v55 = vadd.f32 %v53, 1e-05
  %v56 = vrsqrt.pop %v54
  %v57 = vmul.f32 %v56, %v54
  %v58 = vmul.f32 %v57, %v56
  %v59 = vmul.f32 0.5, %v58
  %v60 = vsub.f32 1.5, %v59
  %v61 = vmul.f32 %v56, %v60
  %vm62 = vweird.f32 %v54
  %vm63 = vweird.f32 %v56
  %vm64 = vmor %vm62, %vm63
  %v65 = vsel %vm64, %v56, %v61
  %v66 = vrsqrt.pop %v55
  %v67 = vmul.f32 %v66, %v55
  %v68 = vmul.f32 %v67, %v66
  %v69 = vmul.f32 0.5, %v68
  %v70 = vsub.f32 1.5, %v69
  %v71 = vmul.f32 %v66, %v70
  %vm72 = vweird.f32 %v55
  %vm73 = vweird.f32 %v66
  %vm74 = vmor %vm72, %vm73
  %v75 = vsel %vm74, %v66, %v71
  %v76 = vmul.f32 %v42, %v65
  %v77 = vmul.f32 %v43, %v75
  %v79 = vperm.slane %v24, 0
  %v81 = vmul.f32 %v76, %v79
  %v82 = vmul.f32 %v77, %v79
  %v84 = vperm.slane %v25, 0
  %v86 = vadd.f32 %v81, %v84
  %v87 = vadd.f32 %v82, %v84
  %v88 = vld [vmem:[%s3] sm:$0x1]
  %v90 = vperm.slane %v88, 0
  %v92 = vmul.f32 %v86, %v90
  %v93 = vmul.f32 %v87, %v90
  %v94 = vsel %vm26, %v92, 0.0
  %95 = vadd.xlane.f32.xlu0 %v94
  %v96 = vpop.xlane.xlu0 %95
  %v97 = vsel %vm26, %v93, 0.0
  %98 = vadd.xlane.f32.xlu0 %v97
  %v99 = vpop.xlane.xlu0 %98
  %v100 = vld [vmem:[#allocation2] sm:$0x1]
  %v102 = vperm.slane %v100, 0
  %v104 = vadd.f32 %v96, %v102
  %v105 = vadd.f32 %v99, %v102
  %vm106 = vcmask 7168
  %107 = vst.msk [vmem:[%s5] sm:$0xff] %vm106, %v104
  %108 = vst.msk [vmem:[%s5 + $0x8] sm:$0xff] %vm106, %v105
  // Predicated region
  $region22: #{transformer_forward.7} parent=0 // pred_check
    _
  $region23: #{transformer_forward.7} parent=0 // pred_check_branch
    %110 = sbr.rel (0) target = $region25
  $region24: #{transformer_forward.7} parent=0 // pred_region
    _
  $region25: #{transformer_forward.7} parent=0 // pred_fallthru
    _
  // Predicated region
  $region26: #{transformer_forward.7} parent=0 // pred_check
    _
  $region27: #{transformer_forward.7} parent=0 // pred_check_branch
    %112 = sbr.rel (0) target = $region29
  $region28: #{transformer_forward.7} parent=0 // pred_region
    _
  $region29: #{transformer_forward.7} parent=0 // pred_fallthru
    _

// kernel: transformer_forward.5
$region0: #{transformer_forward.5}
  #allocation0 [shape = 'u32[]', space=smem, size = 0x4, offset = 0x4, fixed_abs, tag = 'smem constant byte address 0x4 - core index']
  #allocation1 [shape = 'u32[72,128]{1,0:T(1,128)}', space=vmem, size = 0x9000, scoped, tag = 'internal scratch']
  %s0 = inlined_call_operand.vmem [shape: f32[2,8,32], index: 0, kind: input, shape index: {}]
  %s1 = inlined_call_operand.vmem [shape: bf16[32,96], index: 1, kind: input, shape index: {}]
  %s2 = inlined_call_operand.vmem [shape: f32[1,96], index: 2, kind: input, shape index: {}]
  %s3 = inlined_call_operand.vmem [shape: bf16[32,32], index: 3, kind: input, shape index: {}]
  %s4 = inlined_call_operand.vmem [shape: f32[1,32], index: 4, kind: input, shape index: {}]
  %s5 = inlined_call_operand.vmem [shape: f32[1,32], index: 5, kind: input, shape index: {}]
  %s6 = inlined_call_operand.vmem [shape: f32[1,32], index: 6, kind: input, shape index: {}]
  %s7 = inlined_call_operand.vmem [shape: bf16[32,64], index: 7, kind: input, shape index: {}]
  %s8 = inlined_call_operand.vmem [shape: f32[1,64], index: 8, kind: input, shape index: {}]
  %s9 = inlined_call_operand.vmem [shape: bf16[64,32], index: 9, kind: input, shape index: {}]
  %s10 = inlined_call_operand.vmem [shape: f32[1,32], index: 10, kind: input, shape index: {}]
  %s11 = inlined_call_operand.vmem [shape: f32[1,32], index: 11, kind: input, shape index: {}]
  %s12 = inlined_call_operand.vmem [shape: f32[1,32], index: 12, kind: input, shape index: {}]
  %s13 = inlined_call_operand.vmem [shape: f32[2,8,32], index: 13, kind: output, shape index: {}]
  %s14 = sld [smem:[#allocation0]]
  $region62: #{transformer_forward.5} parent=0
    _
  %s16 = ssub.s32 1, %s14
  %s17 = scalar_select 0, %s16, %s14
  // Predicated region
  $region2: #{transformer_forward.5} parent=0 // pred_check
    _
  $region3: #{transformer_forward.5} parent=0 // pred_check_branch
    %19 = sbr.rel (0) target = $region5
  $region4: #{transformer_forward.5} parent=0 // pred_region
    _
  $region5: #{transformer_forward.5} parent=0 // pred_fallthru
    _
  // Predicated region
  $region6: #{transformer_forward.5} parent=0 // pred_check
    _
  $region7: #{transformer_forward.5} parent=0 // pred_check_branch
    %21 = sbr.rel (0) target = $region9
  $region8: #{transformer_forward.5} parent=0 // pred_region
    _
  $region9: #{transformer_forward.5} parent=0 // pred_fallthru
    _
  // Predicated region
  $region10: #{transformer_forward.5} parent=0 // pred_check
    _
  $region11: #{transformer_forward.5} parent=0 // pred_check_branch
    %23 = sbr.rel (0) target = $region13
  $region12: #{transformer_forward.5} parent=0 // pred_region
    _
  $region13: #{transformer_forward.5} parent=0 // pred_fallthru
    _
  // Predicated region
  $region14: #{transformer_forward.5} parent=0 // pred_check
    _
  $region15: #{transformer_forward.5} parent=0 // pred_check_branch
    %25 = sbr.rel (0) target = $region17
  $region16: #{transformer_forward.5} parent=0 // pred_region
    _
  $region17: #{transformer_forward.5} parent=0 // pred_fallthru
    _
  // Predicated region
  $region18: #{transformer_forward.5} parent=0 // pred_check
    _
  $region19: #{transformer_forward.5} parent=0 // pred_check_branch
    %27 = sbr.rel (0) target = $region21
  $region20: #{transformer_forward.5} parent=0 // pred_region
    _
  $region21: #{transformer_forward.5} parent=0 // pred_fallthru
    _
  // Predicated region
  $region22: #{transformer_forward.5} parent=0 // pred_check
    _
  $region23: #{transformer_forward.5} parent=0 // pred_check_branch
    %29 = sbr.rel (0) target = $region25
  $region24: #{transformer_forward.5} parent=0 // pred_region
    _
  $region25: #{transformer_forward.5} parent=0 // pred_fallthru
    _
  // Predicated region
  $region26: #{transformer_forward.5} parent=0 // pred_check
    _
  $region27: #{transformer_forward.5} parent=0 // pred_check_branch
    %31 = sbr.rel (0) target = $region29
  $region28: #{transformer_forward.5} parent=0 // pred_region
    _
  $region29: #{transformer_forward.5} parent=0 // pred_fallthru
    _
  // Predicated region
  $region30: #{transformer_forward.5} parent=0 // pred_check
    _
  $region31: #{transformer_forward.5} parent=0 // pred_check_branch
    %33 = sbr.rel (0) target = $region33
  $region32: #{transformer_forward.5} parent=0 // pred_region
    _
  $region33: #{transformer_forward.5} parent=0 // pred_fallthru
    _
  // Predicated region
  $region34: #{transformer_forward.5} parent=0 // pred_check
    _
  $region35: #{transformer_forward.5} parent=0 // pred_check_branch
    %35 = sbr.rel (0) target = $region37
  $region36: #{transformer_forward.5} parent=0 // pred_region
    _
  $region37: #{transformer_forward.5} parent=0 // pred_fallthru
    _
  // Predicated region
  $region38: #{transformer_forward.5} parent=0 // pred_check
    _
  $region39: #{transformer_forward.5} parent=0 // pred_check_branch
    %37 = sbr.rel (0) target = $region41
  $region40: #{transformer_forward.5} parent=0 // pred_region
    _
  $region41: #{transformer_forward.5} parent=0 // pred_fallthru
    _
  // Predicated region
  $region42: #{transformer_forward.5} parent=0 // pred_check
    _
  $region43: #{transformer_forward.5} parent=0 // pred_check_branch
    %39 = sbr.rel (0) target = $region45
  $region44: #{transformer_forward.5} parent=0 // pred_region
    _
  $region45: #{transformer_forward.5} parent=0 // pred_fallthru
    _
  // Predicated region
  $region46: #{transformer_forward.5} parent=0 // pred_check
    _
  $region47: #{transformer_forward.5} parent=0 // pred_check_branch
    %41 = sbr.rel (0) target = $region49
  $region48: #{transformer_forward.5} parent=0 // pred_region
    _
  $region49: #{transformer_forward.5} parent=0 // pred_fallthru
    _
  // Predicated region
  $region50: #{transformer_forward.5} parent=0 // pred_check
    _
  $region51: #{transformer_forward.5} parent=0 // pred_check_branch
    %43 = sbr.rel (0) target = $region53
  $region52: #{transformer_forward.5} parent=0 // pred_region
    _
  $region53: #{transformer_forward.5} parent=0 // pred_fallthru
    _
  %v45 = vld [vmem:[%s0] sm:$0xff]
  %v46 = vld [vmem:[%s0 + $0x8] sm:$0xff]
  %v47 = vld [vmem:[%s1] sm:$0xf]
  %v48 = vld [vmem:[%s1 + $0x4] sm:$0xf]
  %v49 = vld [vmem:[%s1 + $0x8] sm:$0xf]
  %v50 = vld [vmem:[%s1 + $0xc] sm:$0xf]
  %v51 = vpack.c.bf16 %v46, %v45
  %v52 = vld [vmem:[%s2] sm:$0x1]
  %v54 = vperm.slane %v52, 0
  %v60 = vunpack.c.l.b16 %v47
  %v61 = vunpack.c.l.b16 %v48
  %v62 = vunpack.c.l.b16 %v49
  %v63 = vunpack.c.l.b16 %v50
  %v64 = vpack.c.b16 %v61, %v60
  %v65 = vpack.c.b16 %v63, %v62
  %vm68 = vcmask 261120
  %v70 = vsel %vm68, %v51, 0
  %72 = vmatpush.bf16.msra.mxu0 0
  %73 = vmatpush.bf16.msra.mxu0 0
  %74 = vmatpush.bf16.msra.mxu0 0
  %75 = vmatpush.bf16.msra.mxu0 0
  %76 = vmatpush.bf16.msra.mxu0 0
  %77 = vmatpush.bf16.msra.mxu0 0
  %78 = vmatpush.bf16.msra.mxu0 %v65
  %79 = vmatpush.bf16.msra.mxu0 %v64
  %80 = vmatmul.bf16.gmra.mxu0 %v70
  %v81 = vpop.f32.mrf.mxu0
  %v82 = vadd.f32 %v54, %v81
  %v83 = vpop.f32.mrf.mxu0
  %v84 = vadd.f32 %v54, %v83
  %85 = vdwg.mxu0
  %v86 = vld [vmem:[%s3] sm:$0xf]
  %v87 = vld [vmem:[%s3 + $0x4] sm:$0xf]
  %v88 = vld [vmem:[%s3 + $0x8] sm:$0xf]
  %v89 = vld [vmem:[%s3 + $0xc] sm:$0xf]
  %v90 = vpack.c.bf16 %v82, %v82
  %v91 = vpack.c.bf16 %v84, %v84
  %v93 = vunpack.c.l.b16 %v90
  %v94 = vpack.c.b16 %v93, %v93
  %95 = vrot.lane.b32.xlu0 %v94, 96
  %v96 = vpop.permute.xlu0 %95
  %vm97 = vcmask 64512
  %v99 = vsel %vm97, %v90, 0
  %v102 = vsel %vm97, %v96, 0
  %104 = vmatpush.bf16.xpose.msra.mxu0 0
  %105 = vmatpush.bf16.xpose.msra.mxu0 0
  %106 = vmatpush.bf16.xpose.msra.mxu0 0
  %107 = vmatpush.bf16.xpose.msra.mxu0 0
  %108 = vmatpush.bf16.xpose.msra.mxu0 0
  %109 = vmatpush.bf16.xpose.msra.mxu0 0
  %110 = vmatpush.bf16.xpose.msra.mxu0 0
  %111 = vmatpush.bf16.xpose.msra.mxu0 %v102
  %112 = vmatmul.bf16.gmra.mxu0 %v99
  %v113 = vpop.f32.mrf.mxu0
  %v114 = vadd.f32 0.0, %v113
  %v115 = vpop.f32.mrf.mxu0
  %116 = vdwg.mxu0
  %v118 = vunpack.c.l.b16 %v91
  %v119 = vpack.c.b16 %v118, %v118
  %120 = vrot.lane.b32.xlu0 %v119, 96
  %v121 = vpop.permute.xlu0 %120
  %v123 = vsel %vm97, %v91, 0
  %v126 = vsel %vm97, %v121, 0
  %128 = vmatpush.bf16.xpose.msra.mxu0 0
  %129 = vmatpush.bf16.xpose.msra.mxu0 0
  %130 = vmatpush.bf16.xpose.msra.mxu0 0
  %131 = vmatpush.bf16.xpose.msra.mxu0 0
  %132 = vmatpush.bf16.xpose.msra.mxu0 0
  %133 = vmatpush.bf16.xpose.msra.mxu0 0
  %134 = vmatpush.bf16.xpose.msra.mxu0 0
  %135 = vmatpush.bf16.xpose.msra.mxu0 %v126
  %136 = vmatmul.bf16.gmra.mxu0 %v123
  %v137 = vpop.f32.mrf.mxu0
  %v138 = vadd.f32 0.0, %v137
  %v139 = vpop.f32.mrf.mxu0
  %140 = vdwg.mxu0
  %v141 = vmul.f32 %v114, 0.35355338
  %v142 = vmul.f32 %v138, 0.35355338
  %v143 = vsel %vm97, %v141, -inf
  %144 = vmax.xlane.f32.xlu0 %v143
  %v145 = vpop.xlane.xlu0 %144
  %v146 = vsel %vm97, %v142, -inf
  %147 = vmax.xlane.f32.xlu0 %v146
  %v148 = vpop.xlane.xlu0 %147
  %v149 = vsub.f32 %v141, %v145
  %v150 = vsub.f32 %v142, %v148
  %v151 = vmul.f32 %v149, 1.442695
  %v152 = vpow.pop %v151
  %v153 = vmul.f32 %v150, 1.442695
  %v154 = vpow.pop %v153
  %v155 = vsel %vm97, %v152, 0.0
  %156 = vadd.xlane.f32.xlu0 %v155
  %v157 = vpop.xlane.xlu0 %156
  %v158 = vsel %vm97, %v154, 0.0
  %159 = vadd.xlane.f32.xlu0 %v158
  %v160 = vpop.xlane.xlu0 %159
  %v161 = vrcp.pop %v157
  %v162 = vmul.f32 %v157, %v161
  %v163 = vsub.f32 1.0, %v162
  %v164 = vmul.f32 %v161, %v163
  %v165 = vadd.f32 %v161, %v164
  %vm166 = vweird.f32 %v157
  %vm167 = vweird.f32 %v161
  %vm168 = vmor %vm166, %vm167
  %v169 = vsel %vm168, %v161, %v165
  %v170 = vand.u32 2147483647, %v157
  %vm171 = vcmp.eq.f32.partialorder %v170, 8.507059e+37
  %v172 = vand.u32 %v157, 2147483648
  %v173 = vor.u32 1.1754944e-38, %v172
  %v174 = vsel %vm171, %v173, %v169
  %v175 = vmul.f32 %v152, %v174
  %v176 = vrcp.pop %v160
  %v177 = vmul.f32 %v160, %v176
  %v178 = vsub.f32 1.0, %v177
  %v179 = vmul.f32 %v176, %v178
  %v180 = vadd.f32 %v176, %v179
  %vm181 = vweird.f32 %v160
  %vm182 = vweird.f32 %v176
  %vm183 = vmor %vm181, %vm182
  %v184 = vsel %vm183, %v176, %v180
  %v185 = vand.u32 2147483647, %v160
  %vm186 = vcmp.eq.f32.partialorder %v185, 8.507059e+37
  %v187 = vand.u32 %v160, 2147483648
  %v188 = vor.u32 1.1754944e-38, %v187
  %v189 = vsel %vm186, %v188, %v184
  %v190 = vmul.f32 %v154, %v189
  %v191 = vpack.c.bf16 %v175, %v175
  %v192 = vpack.c.bf16 %v190, %v190
  %193 = vrot.lane.b32.xlu0 %v94, 64
  %v194 = vpop.permute.xlu0 %193
  %v196 = vsel %vm97, %v191, 0
  %vm198 = vcmask 1043456
  %v200 = vsel %vm198, %v194, 0
  %202 = vmatpush.bf16.msra.mxu0 0
  %203 = vmatpush.bf16.msra.mxu0 0
  %204 = vmatpush.bf16.msra.mxu0 0
  %205 = vmatpush.bf16.msra.mxu0 0
  %206 = vmatpush.bf16.msra.mxu0 0
  %207 = vmatpush.bf16.msra.mxu0 0
  %208 = vmatpush.bf16.msra.mxu0 0
  %209 = vmatpush.bf16.msra.mxu0 %v200
  %210 = vmatmul.bf16.gmra.mxu0 %v196
  %v211 = vpop.f32.mrf.mxu0
  %v212 = vadd.f32 0.0, %v211
  %v213 = vpop.f32.mrf.mxu0
  %214 = vdwg.mxu0
  %215 = vrot.lane.b32.xlu0 %v119, 64
  %v216 = vpop.permute.xlu0 %215
  %v218 = vsel %vm97, %v192, 0
  %v221 = vsel %vm198, %v216, 0
  %223 = vmatpush.bf16.msra.mxu0 0
  %224 = vmatpush.bf16.msra.mxu0 0
  %225 = vmatpush.bf16.msra.mxu0 0
  %226 = vmatpush.bf16.msra.mxu0 0
  %227 = vmatpush.bf16.msra.mxu0 0
  %228 = vmatpush.bf16.msra.mxu0 0
  %229 = vmatpush.bf16.msra.mxu0 0
  %230 = vmatpush.bf16.msra.mxu0 %v221
  %231 = vmatmul.bf16.gmra.mxu0 %v218
  %v232 = vpop.f32.mrf.mxu0
  %v233 = vadd.f32 0.0, %v232
  %v234 = vpop.f32.mrf.mxu0
  %235 = vdwg.mxu0
  %v236 = vpack.c.bf16 %v233, %v212
  %237 = vrot.lane.b32.xlu0 %v94, 120
  %v238 = vpop.permute.xlu0 %237
  %239 = vrot.lane.b32.xlu0 %v94, 88
  %v240 = vpop.permute.xlu0 %239
  %v242 = vsel %vm97, %v238, 0
  %v245 = vsel %vm97, %v240, 0
  %247 = vmatpush.bf16.xpose.msra.mxu0 0
  %248 = vmatpush.bf16.xpose.msra.mxu0 0
  %249 = vmatpush.bf16.xpose.msra.mxu0 0
  %250 = vmatpush.bf16.xpose.msra.mxu0 0
  %251 = vmatpush.bf16.xpose.msra.mxu0 0
  %252 = vmatpush.bf16.xpose.msra.mxu0 0
  %253 = vmatpush.bf16.xpose.msra.mxu0 0
  %254 = vmatpush.bf16.xpose.msra.mxu0 %v245
  %255 = vmatmul.bf16.gmra.mxu0 %v242
  %v256 = vpop.f32.mrf.mxu0
  %v257 = vadd.f32 0.0, %v256
  %v258 = vpop.f32.mrf.mxu0
  %259 = vdwg.mxu0
  %260 = vrot.lane.b32.xlu0 %v119, 120
  %v261 = vpop.permute.xlu0 %260
  %262 = vrot.lane.b32.xlu0 %v119, 88
  %v263 = vpop.permute.xlu0 %262
  %v265 = vsel %vm97, %v261, 0
  %v268 = vsel %vm97, %v263, 0
  %270 = vmatpush.bf16.xpose.msra.mxu0 0
  %271 = vmatpush.bf16.xpose.msra.mxu0 0
  %272 = vmatpush.bf16.xpose.msra.mxu0 0
  %273 = vmatpush.bf16.xpose.msra.mxu0 0
  %274 = vmatpush.bf16.xpose.msra.mxu0 0
  %275 = vmatpush.bf16.xpose.msra.mxu0 0
  %276 = vmatpush.bf16.xpose.msra.mxu0 0
  %277 = vmatpush.bf16.xpose.msra.mxu0 %v268
  %278 = vmatmul.bf16.gmra.mxu0 %v265
  %v279 = vpop.f32.mrf.mxu0
  %v280 = vadd.f32 0.0, %v279
  %v281 = vpop.f32.mrf.mxu0
  %282 = vdwg.mxu0
  %v283 = vmul.f32 %v257, 0.35355338
  %v284 = vmul.f32 %v280, 0.35355338
  %v285 = vsel %vm97, %v283, -inf
  %286 = vmax.xlane.f32.xlu0 %v285
  %v287 = vpop.xlane.xlu0 %286
  %v288 = vsel %vm97, %v284, -inf
  %289 = vmax.xlane.f32.xlu0 %v288
  %v290 = vpop.xlane.xlu0 %289
  %v291 = vsub.f32 %v283, %v287
  %v292 = vsub.f32 %v284, %v290
  %v293 = vmul.f32 %v291, 1.442695
  %v294 = vpow.pop %v293
  %v295 = vmul.f32 %v292, 1.442695
  %v296 = vpow.pop %v295
  %v297 = vsel %vm97, %v294, 0.0
  %298 = vadd.xlane.f32.xlu0 %v297
  %v299 = vpop.xlane.xlu0 %298
  %v300 = vsel %vm97, %v296, 0.0
  %301 = vadd.xlane.f32.xlu0 %v300
  %v302 = vpop.xlane.xlu0 %301
  %v303 = vrcp.pop %v299
  %v304 = vmul.f32 %v299, %v303
  %v305 = vsub.f32 1.0, %v304
  %v306 = vmul.f32 %v303, %v305
  %v307 = vadd.f32 %v303, %v306
  %vm308 = vweird.f32 %v299
  %vm309 = vweird.f32 %v303
  %vm310 = vmor %vm308, %vm309
  %v311 = vsel %vm310, %v303, %v307
  %v312 = vand.u32 2147483647, %v299
  %vm313 = vcmp.eq.f32.partialorder %v312, 8.507059e+37
  %v314 = vand.u32 %v299, 2147483648
  %v315 = vor.u32 1.1754944e-38, %v314
  %v316 = vsel %vm313, %v315, %v311
  %v317 = vmul.f32 %v294, %v316
  %v318 = vrcp.pop %v302
  %v319 = vmul.f32 %v302, %v318
  %v320 = vsub.f32 1.0, %v319
  %v321 = vmul.f32 %v318, %v320
  %v322 = vadd.f32 %v318, %v321
  %vm323 = vweird.f32 %v302
  %vm324 = vweird.f32 %v318
  %vm325 = vmor %vm323, %vm324
  %v326 = vsel %vm325, %v318, %v322
  %v327 = vand.u32 2147483647, %v302
  %vm328 = vcmp.eq.f32.partialorder %v327, 8.507059e+37
  %v329 = vand.u32 %v302, 2147483648
  %v330 = vor.u32 1.1754944e-38, %v329
  %v331 = vsel %vm328, %v330, %v326
  %v332 = vmul.f32 %v296, %v331
  %v333 = vpack.c.bf16 %v317, %v317
  %v334 = vpack.c.bf16 %v332, %v332
  %335 = vrot.lane.b32.xlu0 %v94, 56
  %v336 = vpop.permute.xlu0 %335
  %v338 = vsel %vm97, %v333, 0
  %v341 = vsel %vm198, %v336, 0
  %343 = vmatpush.bf16.msra.mxu0 0
  %344 = vmatpush.bf16.msra.mxu0 0
  %345 = vmatpush.bf16.msra.mxu0 0
  %346 = vmatpush.bf16.msra.mxu0 0
  %347 = vmatpush.bf16.msra.mxu0 0
  %348 = vmatpush.bf16.msra.mxu0 0
  %349 = vmatpush.bf16.msra.mxu0 0
  %350 = vmatpush.bf16.msra.mxu0 %v341
  %351 = vmatmul.bf16.gmra.mxu0 %v338
  %v352 = vpop.f32.mrf.mxu0
  %v353 = vadd.f32 0.0, %v352
  %v354 = vpop.f32.mrf.mxu0
  %355 = vdwg.mxu0
  %356 = vrot.lane.b32.xlu0 %v119, 56
  %v357 = vpop.permute.xlu0 %356
  %v359 = vsel %vm97, %v334, 0
  %v362 = vsel %vm198, %v357, 0
  %364 = vmatpush.bf16.msra.mxu0 0
  %365 = vmatpush.bf16.msra.mxu0 0
  %366 = vmatpush.bf16.msra.mxu0 0
  %367 = vmatpush.bf16.msra.mxu0 0
  %368 = vmatpush.bf16.msra.mxu0 0
  %369 = vmatpush.bf16.msra.mxu0 0
  %370 = vmatpush.bf16.msra.mxu0 0
  %371 = vmatpush.bf16.msra.mxu0 %v362
  %372 = vmatmul.bf16.gmra.mxu0 %v359
  %v373 = vpop.f32.mrf.mxu0
  %v374 = vadd.f32 0.0, %v373
  %v375 = vpop.f32.mrf.mxu0
  %376 = vdwg.mxu0
  %v377 = vpack.c.bf16 %v374, %v353
  %v379 = vsel %vm97, %v377, 0
  %v382 = vsel %vm198, %v87, 0
  %384 = vmatpush.bf16.msra.mxu0 0
  %385 = vmatpush.bf16.msra.mxu0 0
  %386 = vmatpush.bf16.msra.mxu0 0
  %387 = vmatpush.bf16.msra.mxu0 0
  %388 = vmatpush.bf16.msra.mxu0 0
  %389 = vmatpush.bf16.msra.mxu0 0
  %390 = vmatpush.bf16.msra.mxu0 0
  %391 = vmatpush.bf16.msra.mxu0 %v382
  %392 = vmatmul.bf16.gmra.mxu0 %v379
  %v393 = vpop.f32.mrf.mxu0
  %v394 = vadd.f32 0.0, %v393
  %v395 = vpop.f32.mrf.mxu0
  %v396 = vadd.f32 0.0, %v395
  %397 = vdwg.mxu0
  %v399 = vsel %vm97, %v236, 0
  %v402 = vsel %vm198, %v86, 0
  %404 = vmatpush.bf16.msra.mxu0 0
  %405 = vmatpush.bf16.msra.mxu0 0
  %406 = vmatpush.bf16.msra.mxu0 0
  %407 = vmatpush.bf16.msra.mxu0 0
  %408 = vmatpush.bf16.msra.mxu0 0
  %409 = vmatpush.bf16.msra.mxu0 0
  %410 = vmatpush.bf16.msra.mxu0 0
  %411 = vmatpush.bf16.msra.mxu0 %v402
  %412 = vmatmul.bf16.gmra.mxu0 %v399
  %v413 = vpop.f32.mrf.mxu0
  %v414 = vadd.f32 %v394, %v413
  %v415 = vpop.f32.mrf.mxu0
  %v416 = vadd.f32 %v396, %v415
  %417 = vdwg.mxu0
  %418 = vrot.lane.b32.xlu0 %v94, 112
  %v419 = vpop.permute.xlu0 %418
  %420 = vrot.lane.b32.xlu0 %v94, 80
  %v421 = vpop.permute.xlu0 %420
  %v423 = vsel %vm97, %v419, 0
  %v426 = vsel %vm97, %v421, 0
  %428 = vmatpush.bf16.xpose.msra.mxu0 0
  %429 = vmatpush.bf16.xpose.msra.mxu0 0
  %430 = vmatpush.bf16.xpose.msra.mxu0 0
  %431 = vmatpush.bf16.xpose.msra.mxu0 0
  %432 = vmatpush.bf16.xpose.msra.mxu0 0
  %433 = vmatpush.bf16.xpose.msra.mxu0 0
  %434 = vmatpush.bf16.xpose.msra.mxu0 0
  %435 = vmatpush.bf16.xpose.msra.mxu0 %v426
  %436 = vmatmul.bf16.gmra.mxu0 %v423
  %v437 = vpop.f32.mrf.mxu0
  %v438 = vadd.f32 0.0, %v437
  %v439 = vpop.f32.mrf.mxu0
  %440 = vdwg.mxu0
  %441 = vrot.lane.b32.xlu0 %v119, 112
  %v442 = vpop.permute.xlu0 %441
  %443 = vrot.lane.b32.xlu0 %v119, 80
  %v444 = vpop.permute.xlu0 %443
  %v446 = vsel %vm97, %v442, 0
  %v449 = vsel %vm97, %v444, 0
  %451 = vmatpush.bf16.xpose.msra.mxu0 0
  %452 = vmatpush.bf16.xpose.msra.mxu0 0
  %453 = vmatpush.bf16.xpose.msra.mxu0 0
  %454 = vmatpush.bf16.xpose.msra.mxu0 0
  %455 = vmatpush.bf16.xpose.msra.mxu0 0
  %456 = vmatpush.bf16.xpose.msra.mxu0 0
  %457 = vmatpush.bf16.xpose.msra.mxu0 0
  %458 = vmatpush.bf16.xpose.msra.mxu0 %v449
  %459 = vmatmul.bf16.gmra.mxu0 %v446
  %v460 = vpop.f32.mrf.mxu0
  %v461 = vadd.f32 0.0, %v460
  %v462 = vpop.f32.mrf.mxu0
  %463 = vdwg.mxu0
  %v464 = vmul.f32 %v438, 0.35355338
  %v465 = vmul.f32 %v461, 0.35355338
  %v466 = vsel %vm97, %v464, -inf
  %467 = vmax.xlane.f32.xlu0 %v466
  %v468 = vpop.xlane.xlu0 %467
  %v469 = vsel %vm97, %v465, -inf
  %470 = vmax.xlane.f32.xlu0 %v469
  %v471 = vpop.xlane.xlu0 %470
  %v472 = vsub.f32 %v464, %v468
  %v473 = vsub.f32 %v465, %v471
  %v474 = vmul.f32 %v472, 1.442695
  %v475 = vpow.pop %v474
  %v476 = vmul.f32 %v473, 1.442695
  %v477 = vpow.pop %v476
  %v478 = vsel %vm97, %v475, 0.0
  %479 = vadd.xlane.f32.xlu0 %v478
  %v480 = vpop.xlane.xlu0 %479
  %v481 = vsel %vm97, %v477, 0.0
  %482 = vadd.xlane.f32.xlu0 %v481
  %v483 = vpop.xlane.xlu0 %482
  %v484 = vrcp.pop %v480
  %v485 = vmul.f32 %v480, %v484
  %v486 = vsub.f32 1.0, %v485
  %v487 = vmul.f32 %v484, %v486
  %v488 = vadd.f32 %v484, %v487
  %vm489 = vweird.f32 %v480
  %vm490 = vweird.f32 %v484
  %vm491 = vmor %vm489, %vm490
  %v492 = vsel %vm491, %v484, %v488
  %v493 = vand.u32 2147483647, %v480
  %vm494 = vcmp.eq.f32.partialorder %v493, 8.507059e+37
  %v495 = vand.u32 %v480, 2147483648
  %v496 = vor.u32 1.1754944e-38, %v495
  %v497 = vsel %vm494, %v496, %v492
  %v498 = vmul.f32 %v475, %v497
  %v499 = vrcp.pop %v483
  %v500 = vmul.f32 %v483, %v499
  %v501 = vsub.f32 1.0, %v500
  %v502 = vmul.f32 %v499, %v501
  %v503 = vadd.f32 %v499, %v502
  %vm504 = vweird.f32 %v483
  %vm505 = vweird.f32 %v499
  %vm506 = vmor %vm504, %vm505
  %v507 = vsel %vm506, %v499, %v503
  %v508 = vand.u32 2147483647, %v483
  %vm509 = vcmp.eq.f32.partialorder %v508, 8.507059e+37
  %v510 = vand.u32 %v483, 2147483648
  %v511 = vor.u32 1.1754944e-38, %v510
  %v512 = vsel %vm509, %v511, %v507
  %v513 = vmul.f32 %v477, %v512
  %v514 = vpack.c.bf16 %v498, %v498
  %v515 = vpack.c.bf16 %v513, %v513
  %516 = vrot.lane.b32.xlu0 %v94, 48
  %v517 = vpop.permute.xlu0 %516
  %v519 = vsel %vm97, %v514, 0
  %v522 = vsel %vm198, %v517, 0
  %524 = vmatpush.bf16.msra.mxu0 0
  %525 = vmatpush.bf16.msra.mxu0 0
  %526 = vmatpush.bf16.msra.mxu0 0
  %527 = vmatpush.bf16.msra.mxu0 0
  %528 = vmatpush.bf16.msra.mxu0 0
  %529 = vmatpush.bf16.msra.mxu0 0
  %530 = vmatpush.bf16.msra.mxu0 0
  %531 = vmatpush.bf16.msra.mxu0 %v522
  %532 = vmatmul.bf16.gmra.mxu0 %v519
  %v533 = vpop.f32.mrf.mxu0
  %v534 = vadd.f32 0.0, %v533
  %v535 = vpop.f32.mrf.mxu0
  %536 = vdwg.mxu0
  %537 = vrot.lane.b32.xlu0 %v119, 48
  %v538 = vpop.permute.xlu0 %537
  %v540 = vsel %vm97, %v515, 0
  %v543 = vsel %vm198, %v538, 0
  %545 = vmatpush.bf16.msra.mxu0 0
  %546 = vmatpush.bf16.msra.mxu0 0
  %547 = vmatpush.bf16.msra.mxu0 0
  %548 = vmatpush.bf16.msra.mxu0 0
  %549 = vmatpush.bf16.msra.mxu0 0
  %550 = vmatpush.bf16.msra.mxu0 0
  %551 = vmatpush.bf16.msra.mxu0 0
  %552 = vmatpush.bf16.msra.mxu0 %v543
  %553 = vmatmul.bf16.gmra.mxu0 %v540
  %v554 = vpop.f32.mrf.mxu0
  %v555 = vadd.f32 0.0, %v554
  %v556 = vpop.f32.mrf.mxu0
  %557 = vdwg.mxu0
  %v558 = vpack.c.bf16 %v555, %v534
  %v560 = vsel %vm97, %v558, 0
  %v563 = vsel %vm198, %v88, 0
  %565 = vmatpush.bf16.msra.mxu0 0
  %566 = vmatpush.bf16.msra.mxu0 0
  %567 = vmatpush.bf16.msra.mxu0 0
  %568 = vmatpush.bf16.msra.mxu0 0
  %569 = vmatpush.bf16.msra.mxu0 0
  %570 = vmatpush.bf16.msra.mxu0 0
  %571 = vmatpush.bf16.msra.mxu0 0
  %572 = vmatpush.bf16.msra.mxu0 %v563
  %573 = vmatmul.bf16.gmra.mxu0 %v560
  %v574 = vpop.f32.mrf.mxu0
  %v575 = vadd.f32 0.0, %v574
  %v576 = vpop.f32.mrf.mxu0
  %v577 = vadd.f32 0.0, %v576
  %578 = vdwg.mxu0
  %v579 = vadd.f32 %v414, %v575
  %v580 = vadd.f32 %v416, %v577
  %581 = vrot.lane.b32.xlu0 %v94, 104
  %v582 = vpop.permute.xlu0 %581
  %583 = vrot.lane.b32.xlu0 %v94, 72
  %v584 = vpop.permute.xlu0 %583
  %v586 = vsel %vm97, %v582, 0
  %v589 = vsel %vm97, %v584, 0
  %591 = vmatpush.bf16.xpose.msra.mxu0 0
  %592 = vmatpush.bf16.xpose.msra.mxu0 0
  %593 = vmatpush.bf16.xpose.msra.mxu0 0
  %594 = vmatpush.bf16.xpose.msra.mxu0 0
  %595 = vmatpush.bf16.xpose.msra.mxu0 0
  %596 = vmatpush.bf16.xpose.msra.mxu0 0
  %597 = vmatpush.bf16.xpose.msra.mxu0 0
  %598 = vmatpush.bf16.xpose.msra.mxu0 %v589
  %599 = vmatmul.bf16.gmra.mxu0 %v586
  %v600 = vpop.f32.mrf.mxu0
  %v601 = vadd.f32 0.0, %v600
  %v602 = vpop.f32.mrf.mxu0
  %603 = vdwg.mxu0
  %604 = vrot.lane.b32.xlu0 %v119, 104
  %v605 = vpop.permute.xlu0 %604
  %606 = vrot.lane.b32.xlu0 %v119, 72
  %v607 = vpop.permute.xlu0 %606
  %v609 = vsel %vm97, %v605, 0
  %v612 = vsel %vm97, %v607, 0
  %614 = vmatpush.bf16.xpose.msra.mxu0 0
  %615 = vmatpush.bf16.xpose.msra.mxu0 0
  %616 = vmatpush.bf16.xpose.msra.mxu0 0
  %617 = vmatpush.bf16.xpose.msra.mxu0 0
  %618 = vmatpush.bf16.xpose.msra.mxu0 0
  %619 = vmatpush.bf16.xpose.msra.mxu0 0
  %620 = vmatpush.bf16.xpose.msra.mxu0 0
  %621 = vmatpush.bf16.xpose.msra.mxu0 %v612
  %622 = vmatmul.bf16.gmra.mxu0 %v609
  %v623 = vpop.f32.mrf.mxu0
  %v624 = vadd.f32 0.0, %v623
  %v625 = vpop.f32.mrf.mxu0
  %626 = vdwg.mxu0
  %v627 = vmul.f32 %v601, 0.35355338
  %v628 = vmul.f32 %v624, 0.35355338
  %v629 = vsel %vm97, %v627, -inf
  %630 = vmax.xlane.f32.xlu0 %v629
  %v631 = vpop.xlane.xlu0 %630
  %v632 = vsel %vm97, %v628, -inf
  %633 = vmax.xlane.f32.xlu0 %v632
  %v634 = vpop.xlane.xlu0 %633
  %v635 = vsub.f32 %v627, %v631
  %v636 = vsub.f32 %v628, %v634
  %v637 = vmul.f32 %v635, 1.442695
  %v638 = vpow.pop %v637
  %v639 = vmul.f32 %v636, 1.442695
  %v640 = vpow.pop %v639
  %v641 = vsel %vm97, %v638, 0.0
  %642 = vadd.xlane.f32.xlu0 %v641
  %v643 = vpop.xlane.xlu0 %642
  %v644 = vsel %vm97, %v640, 0.0
  %645 = vadd.xlane.f32.xlu0 %v644
  %v646 = vpop.xlane.xlu0 %645
  %v647 = vrcp.pop %v643
  %v648 = vmul.f32 %v643, %v647
  %v649 = vsub.f32 1.0, %v648
  %v650 = vmul.f32 %v647, %v649
  %v651 = vadd.f32 %v647, %v650
  %vm652 = vweird.f32 %v643
  %vm653 = vweird.f32 %v647
  %vm654 = vmor %vm652, %vm653
  %v655 = vsel %vm654, %v647, %v651
  %v656 = vand.u32 2147483647, %v643
  %vm657 = vcmp.eq.f32.partialorder %v656, 8.507059e+37
  %v658 = vand.u32 %v643, 2147483648
  %v659 = vor.u32 1.1754944e-38, %v658
  %v660 = vsel %vm657, %v659, %v655
  %v661 = vmul.f32 %v638, %v660
  %v662 = vrcp.pop %v646
  %v663 = vmul.f32 %v646, %v662
  %v664 = vsub.f32 1.0, %v663
  %v665 = vmul.f32 %v662, %v664
  %v666 = vadd.f32 %v662, %v665
  %vm667 = vweird.f32 %v646
  %vm668 = vweird.f32 %v662
  %vm669 = vmor %vm667, %vm668
  %v670 = vsel %vm669, %v662, %v666
  %v671 = vand.u32 2147483647, %v646
  %vm672 = vcmp.eq.f32.partialorder %v671, 8.507059e+37
  %v673 = vand.u32 %v646, 2147483648
  %v674 = vor.u32 1.1754944e-38, %v673
  %v675 = vsel %vm672, %v674, %v670
  %v676 = vmul.f32 %v640, %v675
  %v677 = vpack.c.bf16 %v661, %v661
  %v678 = vpack.c.bf16 %v676, %v676
  %679 = vrot.lane.b32.xlu0 %v94, 40
  %v680 = vpop.permute.xlu0 %679
  %v682 = vsel %vm97, %v677, 0
  %v685 = vsel %vm198, %v680, 0
  %687 = vmatpush.bf16.msra.mxu0 0
  %688 = vmatpush.bf16.msra.mxu0 0
  %689 = vmatpush.bf16.msra.mxu0 0
  %690 = vmatpush.bf16.msra.mxu0 0
  %691 = vmatpush.bf16.msra.mxu0 0
  %692 = vmatpush.bf16.msra.mxu0 0
  %693 = vmatpush.bf16.msra.mxu0 0
  %694 = vmatpush.bf16.msra.mxu0 %v685
  %695 = vmatmul.bf16.gmra.mxu0 %v682
  %v696 = vpop.f32.mrf.mxu0
  %v697 = vadd.f32 0.0, %v696
  %v698 = vpop.f32.mrf.mxu0
  %699 = vdwg.mxu0
  %700 = vrot.lane.b32.xlu0 %v119, 40
  %v701 = vpop.permute.xlu0 %700
  %v703 = vsel %vm97, %v678, 0
  %v706 = vsel %vm198, %v701, 0
  %708 = vmatpush.bf16.msra.mxu0 0
  %709 = vmatpush.bf16.msra.mxu0 0
  %710 = vmatpush.bf16.msra.mxu0 0
  %711 = vmatpush.bf16.msra.mxu0 0
  %712 = vmatpush.bf16.msra.mxu0 0
  %713 = vmatpush.bf16.msra.mxu0 0
  %714 = vmatpush.bf16.msra.mxu0 0
  %715 = vmatpush.bf16.msra.mxu0 %v706
  %716 = vmatmul.bf16.gmra.mxu0 %v703
  %v717 = vpop.f32.mrf.mxu0
  %v718 = vadd.f32 0.0, %v717
  %v719 = vpop.f32.mrf.mxu0
  %720 = vdwg.mxu0
  %v721 = vpack.c.bf16 %v718, %v697
  %v723 = vsel %vm97, %v721, 0
  %v726 = vsel %vm198, %v89, 0
  %728 = vmatpush.bf16.msra.mxu0 0
  %729 = vmatpush.bf16.msra.mxu0 0
  %730 = vmatpush.bf16.msra.mxu0 0
  %731 = vmatpush.bf16.msra.mxu0 0
  %732 = vmatpush.bf16.msra.mxu0 0
  %733 = vmatpush.bf16.msra.mxu0 0
  %734 = vmatpush.bf16.msra.mxu0 0
  %735 = vmatpush.bf16.msra.mxu0 %v726
  %736 = vmatmul.bf16.gmra.mxu0 %v723
  %v737 = vpop.f32.mrf.mxu0
  %v738 = vadd.f32 0.0, %v737
  %v739 = vpop.f32.mrf.mxu0
  %v740 = vadd.f32 0.0, %v739
  %741 = vdwg.mxu0
  %v742 = vadd.f32 %v579, %v738
  %v743 = vadd.f32 %v580, %v740
  %v744 = vld [vmem:[%s4] sm:$0x1]
  %v746 = vperm.slane %v744, 0
  %v748 = vadd.f32 %v742, %v746
  %v749 = vadd.f32 %v743, %v746
  %v750 = vadd.f32 %v45, %v748
  %v751 = vadd.f32 %v46, %v749
  %v752 = vld [vmem:[%s5] sm:$0x1]
  %v753 = vld [vmem:[%s6] sm:$0x1]
  %v754 = vsel %vm68, %v750, 0.0
  %755 = vadd.xlane.f32.xlu0 %v754
  %v756 = vpop.xlane.xlu0 %755
  %v757 = vsel %vm68, %v751, 0.0
  %758 = vadd.xlane.f32.xlu0 %v757
  %v759 = vpop.xlane.xlu0 %758
  %v760 = vrcp.pop 32.0
  %v761 = vmul.f32 32.0, %v760
  %v762 = vsub.f32 1.0, %v761
  %v763 = vmul.f32 %v760, %v762
  %v764 = vadd.f32 %v760, %v763
  %vm765 = vweird.f32 %v760
  %v766 = vsel %vm765, %v760, %v764
  %v767 = vmul.f32 %v756, %v766
  %v768 = vmul.f32 %v759, %v766
  %v769 = vsub.f32 %v750, %v767
  %v770 = vsub.f32 %v751, %v768
  %v771 = vmul.f32 %v769, %v769
  %v772 = vmul.f32 %v770, %v770
  %v773 = vsel %vm68, %v771, 0.0
  %774 = vadd.xlane.f32.xlu0 %v773
  %v775 = vpop.xlane.xlu0 %774
  %v776 = vsel %vm68, %v772, 0.0
  %777 = vadd.xlane.f32.xlu0 %v776
  %v778 = vpop.xlane.xlu0 %777
  %v779 = vmul.f32 %v775, %v766
  %v780 = vmul.f32 %v778, %v766
  %v781 = vadd.f32 %v779, 1e-05
  %v782 = vadd.f32 %v780, 1e-05
  %v783 = vrsqrt.pop %v781
  %v784 = vmul.f32 %v783, %v781
  %v785 = vmul.f32 %v784, %v783
  %v786 = vmul.f32 0.5, %v785
  %v787 = vsub.f32 1.5, %v786
  %v788 = vmul.f32 %v783, %v787
  %vm789 = vweird.f32 %v781
  %vm790 = vweird.f32 %v783
  %vm791 = vmor %vm789, %vm790
  %v792 = vsel %vm791, %v783, %v788
  %v793 = vrsqrt.pop %v782
  %v794 = vmul.f32 %v793, %v782
  %v795 = vmul.f32 %v794, %v793
  %v796 = vmul.f32 0.5, %v795
  %v797 = vsub.f32 1.5, %v796
  %v798 = vmul.f32 %v793, %v797
  %vm799 = vweird.f32 %v782
  %vm800 = vweird.f32 %v793
  %vm801 = vmor %vm799, %vm800
  %v802 = vsel %vm801, %v793, %v798
  %v803 = vmul.f32 %v769, %v792
  %v804 = vmul.f32 %v770, %v802
  %v806 = vperm.slane %v752, 0
  %v808 = vmul.f32 %v803, %v806
  %v809 = vmul.f32 %v804, %v806
  %v811 = vperm.slane %v753, 0
  %v813 = vadd.f32 %v808, %v811
  %v814 = vadd.f32 %v809, %v811
  %v815 = vld [vmem:[%s7] sm:$0xf]
  %v816 = vld [vmem:[%s7 + $0x4] sm:$0xf]
  %v817 = vld [vmem:[%s7 + $0x8] sm:$0xf]
  %v818 = vld [vmem:[%s7 + $0xc] sm:$0xf]
  %v819 = vpack.c.bf16 %v814, %v813
  %v820 = vld [vmem:[%s8] sm:$0x1]
  %v822 = vperm.slane %v820, 0
  %v828 = vunpack.c.l.b16 %v815
  %v829 = vunpack.c.l.b16 %v816
  %v830 = vunpack.c.l.b16 %v817
  %v831 = vunpack.c.l.b16 %v818
  %v832 = vpack.c.b16 %v829, %v828
  %v833 = vpack.c.b16 %v831, %v830
  %v837 = vsel %vm68, %v819, 0
  %839 = vmatpush.bf16.msra.mxu0 0
  %840 = vmatpush.bf16.msra.mxu0 0
  %841 = vmatpush.bf16.msra.mxu0 0
  %842 = vmatpush.bf16.msra.mxu0 0
  %843 = vmatpush.bf16.msra.mxu0 0
  %844 = vmatpush.bf16.msra.mxu0 0
  %845 = vmatpush.bf16.msra.mxu0 %v833
  %846 = vmatpush.bf16.msra.mxu0 %v832
  %847 = vmatmul.bf16.gmra.mxu0 %v837
  %v848 = vpop.f32.mrf.mxu0
  %v849 = vadd.f32 %v822, %v848
  %v850 = vpop.f32.mrf.mxu0
  %v851 = vadd.f32 %v822, %v850
  %852 = vdwg.mxu0
  %v853 = vmul.f32 %v849, 0.5
  %v854 = vmul.f32 %v851, 0.5
  %v855 = vmul.f32 %v849, 0.70710677
  %v856 = vmul.f32 %v851, 0.70710677
  %v857 = vand.u32 2147483647, %v855
  %v858 = vand.u32 2147483647, %v856
  %v859 = vmul.f32 %v857, 0.3275911
  %v860 = vmul.f32 %v858, 0.3275911
  %v861 = vadd.f32 %v859, 1.0
  %v862 = vadd.f32 %v860, 1.0
  %v863 = vrcp.pop %v861
  %v864 = vmul.f32 %v861, %v863
  %v865 = vsub.f32 1.0, %v864
  %v866 = vmul.f32 %v863, %v865
  %v867 = vadd.f32 %v863, %v866
  %vm868 = vweird.f32 %v861
  %vm869 = vweird.f32 %v863
  %vm870 = vmor %vm868, %vm869
  %v871 = vsel %vm870, %v863, %v867
  %v872 = vand.u32 2147483647, %v861
  %vm873 = vcmp.eq.f32.partialorder %v872, 8.507059e+37
  %v874 = vand.u32 %v861, 2147483648
  %v875 = vor.u32 1.1754944e-38, %v874
  %v876 = vsel %vm873, %v875, %v871
  %v877 = vmul.f32 1.0, %v876
  %v878 = vrcp.pop %v862
  %v879 = vmul.f32 %v862, %v878
  %v880 = vsub.f32 1.0, %v879
  %v881 = vmul.f32 %v878, %v880
  %v882 = vadd.f32 %v878, %v881
  %vm883 = vweird.f32 %v862
  %vm884 = vweird.f32 %v878
  %vm885 = vmor %vm883, %vm884
  %v886 = vsel %vm885, %v878, %v882
  %v887 = vand.u32 2147483647, %v862
  %vm888 = vcmp.eq.f32.partialorder %v887, 8.507059e+37
  %v889 = vand.u32 %v862, 2147483648
  %v890 = vor.u32 1.1754944e-38, %v889
  %v891 = vsel %vm888, %v890, %v886
  %v892 = vmul.f32 1.0, %v891
  %v893 = vmul.f32 %v877, 1.0614054
  %v894 = vmul.f32 %v892, 1.0614054
  %v895 = vadd.f32 %v893, -1.4531521
  %v896 = vadd.f32 %v894, -1.4531521
  %v897 = vmul.f32 %v895, %v877
  %v898 = vmul.f32 %v896, %v892
  %v899 = vadd.f32 %v897, 1.4214138
  %v900 = vadd.f32 %v898, 1.4214138
  %v901 = vmul.f32 %v899, %v877
  %v902 = vmul.f32 %v900, %v892
  %v903 = vadd.f32 %v901, -0.28449672
  %v904 = vadd.f32 %v902, -0.28449672
  %v905 = vmul.f32 %v903, %v877
  %v906 = vmul.f32 %v904, %v892
  %v907 = vadd.f32 %v905, 0.2548296
  %v908 = vadd.f32 %v906, 0.2548296
  %v909 = vmul.f32 %v907, %v877
  %v910 = vmul.f32 %v908, %v892
  %v911 = vsub.f32 0.0, %v857
  %v912 = vsub.f32 0.0, %v858
  %v913 = vmul.f32 %v911, %v857
  %v914 = vmul.f32 %v912, %v858
  %v915 = vmul.f32 %v913, 1.442695
  %v916 = vpow.pop %v915
  %v917 = vmul.f32 %v914, 1.442695
  %v918 = vpow.pop %v917
  %v919 = vmul.f32 %v909, %v916
  %v920 = vmul.f32 %v910, %v918
  %v921 = vsub.f32 1.0, %v919
  %v922 = vsub.f32 1.0, %v920
  %vm923 = vcmp.lt.f32.partialorder %v855, 0.0
  %vm924 = vcmp.lt.f32.partialorder %v856, 0.0
  %v925 = vsub.f32 0.0, %v921
  %v926 = vsub.f32 0.0, %v922
  %v927 = vsel %vm923, %v925, %v921
  %v928 = vsel %vm924, %v926, %v922
  %v929 = vadd.f32 %v927, 1.0
  %v930 = vadd.f32 %v928, 1.0
  %v931 = vmul.f32 %v853, %v929
  %v932 = vmul.f32 %v854, %v930
  %v933 = vld [vmem:[%s9] sm:$0xf]
  %v934 = vld [vmem:[%s9 + $0x4] sm:$0xf]
  %v935 = vld [vmem:[%s9 + $0x8] sm:$0xf]
  %v936 = vld [vmem:[%s9 + $0xc] sm:$0xf]
  %v937 = vld [vmem:[%s9 + $0x10] sm:$0xf]
  %v938 = vld [vmem:[%s9 + $0x14] sm:$0xf]
  %v939 = vld [vmem:[%s9 + $0x18] sm:$0xf]
  %v940 = vld [vmem:[%s9 + $0x1c] sm:$0xf]
  %v941 = vpack.c.bf16 %v932, %v931
  %v942 = vld [vmem:[%s10] sm:$0x1]
  %v944 = vperm.slane %v942, 0
  %v954 = vunpack.c.l.b16 %v933
  %v955 = vunpack.c.l.b16 %v934
  %v956 = vunpack.c.l.b16 %v935
  %v957 = vunpack.c.l.b16 %v936
  %v958 = vunpack.c.l.b16 %v937
  %v959 = vunpack.c.l.b16 %v938
  %v960 = vunpack.c.l.b16 %v939
  %v961 = vunpack.c.l.b16 %v940
  %v962 = vpack.c.b16 %v955, %v954
  %v963 = vpack.c.b16 %v957, %v956
  %v964 = vpack.c.b16 %v959, %v958
  %v965 = vpack.c.b16 %v961, %v960
  %vm970 = vcmask 523264
  %v972 = vsel %vm970, %v941, 0
  %974 = vmatpush.bf16.msra.mxu0 0
  %975 = vmatpush.bf16.msra.mxu0 0
  %976 = vmatpush.bf16.msra.mxu0 0
  %977 = vmatpush.bf16.msra.mxu0 0
  %978 = vmatpush.bf16.msra.mxu0 %v965
  %979 = vmatpush.bf16.msra.mxu0 %v964
  %980 = vmatpush.bf16.msra.mxu0 %v963
  %981 = vmatpush.bf16.msra.mxu0 %v962
  %982 = vmatmul.bf16.gmra.mxu0 %v972
  %v983 = vpop.f32.mrf.mxu0
  %v984 = vadd.f32 %v944, %v983
  %v985 = vpop.f32.mrf.mxu0
  %v986 = vadd.f32 %v944, %v985
  %987 = vdwg.mxu0
  %v988 = vadd.f32 %v813, %v984
  %v989 = vadd.f32 %v814, %v986
  %v990 = vld [vmem:[%s11] sm:$0x1]
  %v991 = vld [vmem:[%s12] sm:$0x1]
  %v992 = vsel %vm68, %v988, 0.0
  %993 = vadd.xlane.f32.xlu0 %v992
  %v994 = vpop.xlane.xlu0 %993
  %v995 = vsel %vm68, %v989, 0.0
  %996 = vadd.xlane.f32.xlu0 %v995
  %v997 = vpop.xlane.xlu0 %996
  %v998 = vmul.f32 %v994, %v766
  %v999 = vmul.f32 %v997, %v766
  %v1000 = vsub.f32 %v988, %v998
  %v1001 = vsub.f32 %v989, %v999
  %v1002 = vmul.f32 %v1000, %v1000
  %v1003 = vmul.f32 %v1001, %v1001
  %v1004 = vsel %vm68, %v1002, 0.0
  %1005 = vadd.xlane.f32.xlu0 %v1004
  %v1006 = vpop.xlane.xlu0 %1005
  %v1007 = vsel %vm68, %v1003, 0.0
  %1008 = vadd.xlane.f32.xlu0 %v1007
  %v1009 = vpop.xlane.xlu0 %1008
  %v1010 = vmul.f32 %v1006, %v766
  %v1011 = vmul.f32 %v1009, %v766
  %v1012 = vadd.f32 %v1010, 1e-05
  %v1013 = vadd.f32 %v1011, 1e-05
  %v1014 = vrsqrt.pop %v1012
  %v1015 = vmul.f32 %v1014, %v1012
  %v1016 = vmul.f32 %v1015, %v1014
  %v1017 = vmul.f32 0.5, %v1016
  %v1018 = vsub.f32 1.5, %v1017
  %v1019 = vmul.f32 %v1014, %v1018
  %vm1020 = vweird.f32 %v1012
  %vm1021 = vweird.f32 %v1014
  %vm1022 = vmor %vm1020, %vm1021
  %v1023 = vsel %vm1022, %v1014, %v1019
  %v1024 = vrsqrt.pop %v1013
  %v1025 = vmul.f32 %v1024, %v1013
  %v1026 = vmul.f32 %v1025, %v1024
  %v1027 = vmul.f32 0.5, %v1026
  %v1028 = vsub.f32 1.5, %v1027
  %v1029 = vmul.f32 %v1024, %v1028
  %vm1030 = vweird.f32 %v1013
  %vm1031 = vweird.f32 %v1024
  %vm1032 = vmor %vm1030, %vm1031
  %v1033 = vsel %vm1032, %v1024, %v1029
  %v1034 = vmul.f32 %v1000, %v1023
  %v1035 = vmul.f32 %v1001, %v1033
  %v1037 = vperm.slane %v990, 0
  %v1039 = vmul.f32 %v1034, %v1037
  %v1040 = vmul.f32 %v1035, %v1037
  %v1042 = vperm.slane %v991, 0
  %v1044 = vadd.f32 %v1039, %v1042
  %v1045 = vadd.f32 %v1040, %v1042
  %1046 = vst.msk [vmem:[%s13] sm:$0xff] %vm68, %v1044
  %1047 = vst.msk [vmem:[%s13 + $0x8] sm:$0xff] %vm68, %v1045
  // Predicated region
  $region54: #{transformer_forward.5} parent=0 // pred_check
    _
  $region55: #{transformer_forward.5} parent=0 // pred_check_branch
    %1049 = sbr.rel (0) target = $region57
  $region56: #{transformer_forward.5} parent=0 // pred_region
    _
  $region57: #{transformer_forward.5} parent=0 // pred_fallthru
    _
  // Predicated region
  $region58: #{transformer_forward.5} parent=0 // pred_check
    _
  $region59: #{transformer_forward.5} parent=0 // pred_check_branch
    %1051 = sbr.rel (0) target = $region61
  $region60: #{transformer_forward.5} parent=0 // pred_region
    _
  $region61: #{transformer_forward.5} parent=0 // pred_fallthru
    _

</llo_original>
